<compile_context>
chip_gen: v5e
topology: v5e:2x2
jax: 0.10.0
libtpu: 0.0.40
codegen_flags: <defaults>
</compile_context>

<pallas_src>
import functools

import jax
import jax.numpy as jnp
from jax.experimental import pallas as pl
from jax.experimental.pallas import tpu as pltpu


def _round_up(n, m):
    return ((n + m - 1) // m) * m


# --------------------------------------------------------------------------- #
# Kernel
# --------------------------------------------------------------------------- #
def tgcn_cell_kernel(x_ref, h_ref, wx_ref, whzr_ref, whh_ref, b_ref, o_ref, *,
                     dpad):
    x = x_ref[...]                      # (tm, Din_pad)
    h = h_ref[...]                      # (tm, Dpad)

    # Fused x-side pre-activations for [z | r | h_tilde] plus all biases.
    xw = jnp.dot(x, wx_ref[...],
                 preferred_element_type=jnp.float32) + b_ref[...]   # (tm, 3*Dpad)
    # Fused h-side pre-activations for [z | r].
    zr = jnp.dot(h, whzr_ref[...],
                 preferred_element_type=jnp.float32)                # (tm, 2*Dpad)

    # One fused sigmoid over the z|r block; z/r are free 128-lane slices.
    zr_act = jax.nn.sigmoid(xw[:, :2 * dpad] + zr)
    z = zr_act[:, :dpad]
    r = zr_act[:, dpad:]

    h_tilde = jnp.tanh(
        xw[:, 2 * dpad:]
        + jnp.dot(r * h, whh_ref[...], preferred_element_type=jnp.float32))

    # H_gru = Z * h + (1 - Z) * H_tilde   (padded lanes stay exactly 0)
    o_ref[...] = z * h + (1.0 - z) * h_tilde


# --------------------------------------------------------------------------- #
# Wrapper
# --------------------------------------------------------------------------- #
def _default_vmem_limit_bytes():
    """~75% of physical VMEM (96 MiB on v5e/v6e, 48 MiB on v7x); safe fallback."""
    try:
        info = pltpu.get_tpu_info()
        cap = getattr(info, "vmem_capacity_bytes", None)
        if cap:
            return int(min(cap * 3 // 4, 96 << 20))
    except Exception:
        pass
    return 48 << 20


def _pick_tm(m_rows, din_pad, dpad, vmem_limit_bytes):
    """Row tile sized from live bytes/row, capped so grid_m >= 2 (ideally 4)."""
    weight_bytes = 4 * (din_pad * 3 * dpad + dpad * 2 * dpad + dpad * dpad
                        + 3 * dpad)
    # Double-buffered IO tiles (x, h, out) + f32 temps (xw, zr, zr_act, h_tilde, out).
    per_row_bytes = 4 * (2 * (din_pad + 2 * dpad) + (din_pad + 9 * dpad))
    budget = max(vmem_limit_bytes - weight_bytes, vmem_limit_bytes // 4)
    tm = ((int(budget * 0.5) // per_row_bytes) // 8) * 8
    tm = max(8, min(tm, 512))

    # Keep multiple grid steps: megacore sharding on v7x + DMA/compute overlap.
    rows8 = _round_up(max(m_rows, 1), 8)
    if rows8 >= 32:
        target_steps = 4
    elif rows8 >= 16:
        target_steps = 2
    else:
        target_steps = 1
    tm = min(tm, max(8, _round_up(pl.cdiv(rows8, target_steps), 8)))
    return tm


@functools.partial(jax.jit,
                   static_argnames=("tm", "vmem_limit_bytes", "single_buffer"))
def _tgcn_cell_impl(x, h, wx_all, wh_zr, whh, b_all, *, tm, vmem_limit_bytes,
                    single_buffer):
    B, N, Din = x.shape
    Dout = h.shape[-1]
    din_pad = wx_all.shape[0]
    dpad = whh.shape[0]
    M = B * N
    Mp = _round_up(M, tm)
    grid_m = Mp // tm

    # Only pad / copy when shapes are actually ragged; otherwise pass through.
    x2 = x.reshape(M, Din).astype(jnp.float32)
    if (Mp != M) or (din_pad != Din):
        x2 = jnp.pad(x2, ((0, Mp - M), (0, din_pad - Din)))
    h2 = h.reshape(M, Dout).astype(jnp.float32)
    if (Mp != M) or (dpad != Dout):
        h2 = jnp.pad(h2, ((0, Mp - M), (0, dpad - Dout)))

    def _weight_spec(shape):
        if single_buffer and hasattr(pl, "Buffered"):
            return pl.BlockSpec(shape, lambda i: (0, 0),
                                pipeline_mode=pl.Buffered(1))
        return pl.BlockSpec(shape, lambda i: (0, 0))

    out = pl.pallas_call(
        functools.partial(tgcn_cell_kernel, dpad=dpad),
        out_shape=jax.ShapeDtypeStruct((Mp, dpad), jnp.float32),
        grid_spec=pltpu.PrefetchScalarGridSpec(
            num_scalar_prefetch=0,
            grid=(grid_m,),
            in_specs=[
                pl.BlockSpec((tm, din_pad), lambda i: (i, 0)),   # x rows
                pl.BlockSpec((tm, dpad), lambda i: (i, 0)),      # h rows
                _weight_spec((din_pad, 3 * dpad)),               # Wx_all
                _weight_spec((dpad, 2 * dpad)),                  # Wh_zr
                _weight_spec((dpad, dpad)),                      # Whh
                _weight_spec((1, 3 * dpad)),                     # biases
            ],
            out_specs=pl.BlockSpec((tm, dpad), lambda i: (i, 0)),
        ),
        compiler_params=pltpu.CompilerParams(
            dimension_semantics=("parallel",),
            vmem_limit_bytes=vmem_limit_bytes),
    )(x2, h2, wx_all, wh_zr, whh, b_all)

    if (Mp != M) or (dpad != Dout):
        out = out[:M, :Dout]
    return out.reshape(B, N, Dout)


def tgcn_cell(x, h, packed_params, *, tm=None, vmem_limit_bytes=None):
    """x: (B, N, Din), h: (B, N, Dout). Returns (B, N, Dout)."""
    B, N, _ = x.shape
    wx_all, wh_zr, whh, b_all = packed_params
    din_pad = wx_all.shape[0]
    dpad = whh.shape[0]
    M = B * N

    if vmem_limit_bytes is None:
        vmem_limit_bytes = _default_vmem_limit_bytes()
    if tm is None:
        tm = _pick_tm(M, din_pad, dpad, vmem_limit_bytes)
    tm = max(8, (int(tm) // 8) * 8)

    try:
        return _tgcn_cell_impl(x, h, wx_all, wh_zr, whh, b_all, tm=tm,
                               vmem_limit_bytes=int(vmem_limit_bytes),
                               single_buffer=True)
    except Exception:
        # Fallback if this JAX build rejects pipeline_mode=pl.Buffered(1).
        return _tgcn_cell_impl(x, h, wx_all, wh_zr, whh, b_all, tm=tm,
                               vmem_limit_bytes=int(vmem_limit_bytes),
                               single_buffer=False)


# --------------------------------------------------------------------------- #
# Parameters
# --------------------------------------------------------------------------- #
def init_params(key, input_dim, out_dim):
    """Raw params in nn.Linear layout: per gate weight (Dout, Din+Dout), bias (Dout,)."""
    fan_in = input_dim + out_dim
    bound = 1.0 / float(fan_in) ** 0.5
    keys = jax.random.split(key, 6)
    params = []
    for g in range(3):  # order: Z, R, H_tilde
        w = jax.random.uniform(keys[2 * g], (out_dim, fan_in),
                               minval=-bound, maxval=bound, dtype=jnp.float32)
        b = jax.random.uniform(keys[2 * g + 1], (out_dim,),
                               minval=-bound, maxval=bound, dtype=jnp.float32)
        params.append((w, b))
    return tuple(params)


def pack_params(params, input_dim, out_dim):
    """Fuse + pad the gate weights for the kernel.

    Returns:
      wx_all : (Din_pad, 3*Dpad)  x-side weights of [z | r | h_tilde]
      wh_zr  : (Dpad, 2*Dpad)     h-side weights of [z | r]
      whh    : (Dpad, Dpad)       h-side weight of h_tilde (applied to r*h)
      b_all  : (1, 3*Dpad)        biases of [z | r | h_tilde]
    All padding entries are zero so the padded math equals the unpadded math.
    """
    din_pad = _round_up(max(input_dim, 1), 8)
    dpad = _round_up(out_dim, 128)

    def split(w):
        wt = w.T.astype(jnp.float32)       # (Din+Dout, Dout)
        return wt[:input_dim], wt[input_dim:]

    def pad2(a, rows, cols):
        return jnp.zeros((rows, cols), jnp.float32).at[:a.shape[0], :a.shape[1]].set(a)

    def pad_b(b):
        return jnp.zeros((1, dpad), jnp.float32).at[0, :b.shape[0]].set(
            b.astype(jnp.float32))

    (wz, bz), (wr, br), (wh, bh) = params
    wzx, wzh = split(wz)
    wrx, wrh = split(wr)
    whx, whh = split(wh)

    wx_all = jnp.concatenate([pad2(wzx, din_pad, dpad),
                              pad2(wrx, din_pad, dpad),
                              pad2(whx, din_pad, dpad)], axis=1)
    wh_zr = jnp.concatenate([pad2(wzh, dpad, dpad),
                             pad2(wrh, dpad, dpad)], axis=1)
    whh_p = pad2(whh, dpad, dpad)
    b_all = jnp.concatenate([pad_b(bz), pad_b(br), pad_b(bh)], axis=1)
    return wx_all, wh_zr, whh_p, b_all


def tgcn_cell_ref(x, h, params):
    """Pure-JAX reference matching the PyTorch forward (in float32)."""
    (wz, bz), (wr, br), (wh, bh) = params
    x = x.astype(jnp.float32)
    h = h.astype(jnp.float32)
    xh = jnp.concatenate([x, h], axis=2)
    z = jax.nn.sigmoid(xh @ wz.T + bz)
    r = jax.nn.sigmoid(xh @ wr.T + br)
    xrh = jnp.concatenate([x, r * h], axis=2)
    h_tilde = jnp.tanh(xrh @ wh.T + bh)
    return z * h + (1.0 - z) * h_tilde


if __name__ == "__main__":
    key = jax.random.PRNGKey(0)
    k_param, k_x, k_h = jax.random.split(key, 3)

    batch = 2
    num_nodes = 16
    input_dim = 4
    out_dim = 32

    raw_params = init_params(k_param, input_dim, out_dim)
    packed = pack_params(raw_params, input_dim, out_dim)

    x = jax.random.normal(k_x, (batch, num_nodes, input_dim), dtype=jnp.float32)
    h = jax.random.normal(k_h, (batch, num_nodes, out_dim), dtype=jnp.float32)

    out = tgcn_cell(x, h, packed)
    out = jax.block_until_ready(out)

    ref = tgcn_cell_ref(x, h, raw_params)
    assert out.shape == (batch, num_nodes, out_dim)
    assert jnp.allclose(out, ref, atol=1e-5, rtol=1e-5), (
        float(jnp.max(jnp.abs(out - ref))))

    print("KERNEL_OK")
</pallas_src>

<mosaic_0001>
module attributes {stable_mosaic.version = 11 : i64} {
  func.func @tgcn_cell_kernel(%arg0: i32, %arg1: memref<8x8xf32, #tpu.memory_space<vmem>>, %arg2: memref<8x128xf32, #tpu.memory_space<vmem>>, %arg3: memref<8x384xf32, #tpu.memory_space<vmem>>, %arg4: memref<128x256xf32, #tpu.memory_space<vmem>>, %arg5: memref<128x128xf32, #tpu.memory_space<vmem>>, %arg6: memref<1x384xf32, #tpu.memory_space<vmem>>, %arg7: memref<8x128xf32, #tpu.memory_space<vmem>>) attributes {dimension_semantics = [#tpu.dimension_semantics<parallel>], iteration_bounds = array<i64: 4>, scalar_prefetch = 0 : i64, scratch_operands = 0 : i64, tpu.core_type = #tpu.core_type<tc>, window_params = [{transform_indices = @transform_0, window_bounds = array<i64: 8, 8>}, {transform_indices = @transform_1, window_bounds = array<i64: 8, 128>}, {pipeline_mode = #tpu.pipeline_mode<synchronous>, transform_indices = @transform_2, window_bounds = array<i64: 8, 384>}, {pipeline_mode = #tpu.pipeline_mode<synchronous>, transform_indices = @transform_3, window_bounds = array<i64: 128, 256>}, {pipeline_mode = #tpu.pipeline_mode<synchronous>, transform_indices = @transform_4, window_bounds = array<i64: 128, 128>}, {pipeline_mode = #tpu.pipeline_mode<synchronous>, transform_indices = @transform_5, window_bounds = array<i64: 1, 384>}, {transform_indices = @transform_6, window_bounds = array<i64: 8, 128>}]} {
    %c0 = arith.constant 0 : index
    %c0_0 = arith.constant 0 : index
    %0 = vector.load %arg1[%c0, %c0_0] : memref<8x8xf32, #tpu.memory_space<vmem>>, vector<8x8xf32>
    %c0_1 = arith.constant 0 : index
    %c0_2 = arith.constant 0 : index
    %1 = vector.load %arg2[%c0_1, %c0_2] : memref<8x128xf32, #tpu.memory_space<vmem>>, vector<8x128xf32>
    %c0_3 = arith.constant 0 : index
    %c0_4 = arith.constant 0 : index
    %2 = vector.load %arg3[%c0_3, %c0_4] : memref<8x384xf32, #tpu.memory_space<vmem>>, vector<8x384xf32>
    %cst = arith.constant dense<0.000000e+00> : vector<8x384xf32>
    %3 = tpu.matmul %0, %2, %cst {dimension_numbers = #tpu.dot_dimension_numbers<[1], [0], [0], [1], [0, 0, 1, 1], [], []>} : vector<8x8xf32>, vector<8x384xf32>, vector<8x384xf32> -> vector<8x384xf32>
    %c0_5 = arith.constant 0 : index
    %c0_6 = arith.constant 0 : index
    %4 = vector.load %arg6[%c0_5, %c0_6] : memref<1x384xf32, #tpu.memory_space<vmem>>, vector<1x384xf32>
    %5 = vector.broadcast %4 : vector<1x384xf32> to vector<8x384xf32>
    %6 = arith.addf %3, %5 : vector<8x384xf32>
    %c0_7 = arith.constant 0 : index
    %c0_8 = arith.constant 0 : index
    %7 = vector.load %arg4[%c0_7, %c0_8] : memref<128x256xf32, #tpu.memory_space<vmem>>, vector<128x256xf32>
    %cst_9 = arith.constant dense<0.000000e+00> : vector<8x256xf32>
    %8 = tpu.matmul %1, %7, %cst_9 {dimension_numbers = #tpu.dot_dimension_numbers<[1], [0], [0], [1], [0, 0, 1, 1], [], []>} : vector<8x128xf32>, vector<128x256xf32>, vector<8x256xf32> -> vector<8x256xf32>
    %9 = vector.extract_strided_slice %6 {offsets = [0, 0], sizes = [8, 256], strides = [1, 1]} : vector<8x384xf32> to vector<8x256xf32>
    %10 = arith.addf %9, %8 : vector<8x256xf32>
    %11 = arith.negf %10 : vector<8x256xf32>
    %12 = math.exp %11 : vector<8x256xf32>
    %cst_10 = arith.constant 1.000000e+00 : f32
    %13 = vector.broadcast %cst_10 : f32 to vector<8x256xf32>
    %14 = arith.addf %13, %12 : vector<8x256xf32>
    %15 = arith.divf %13, %14 : vector<8x256xf32>
    %16 = vector.extract_strided_slice %15 {offsets = [0, 0], sizes = [8, 128], strides = [1, 1]} : vector<8x256xf32> to vector<8x128xf32>
    %17 = vector.extract_strided_slice %15 {offsets = [0, 128], sizes = [8, 128], strides = [1, 1]} : vector<8x256xf32> to vector<8x128xf32>
    %18 = vector.extract_strided_slice %6 {offsets = [0, 256], sizes = [8, 128], strides = [1, 1]} : vector<8x384xf32> to vector<8x128xf32>
    %19 = arith.mulf %17, %1 : vector<8x128xf32>
    %c0_11 = arith.constant 0 : index
    %c0_12 = arith.constant 0 : index
    %20 = vector.load %arg5[%c0_11, %c0_12] : memref<128x128xf32, #tpu.memory_space<vmem>>, vector<128x128xf32>
    %cst_13 = arith.constant dense<0.000000e+00> : vector<8x128xf32>
    %21 = tpu.matmul %19, %20, %cst_13 {dimension_numbers = #tpu.dot_dimension_numbers<[1], [0], [0], [1], [0, 0, 1, 1], [], []>} : vector<8x128xf32>, vector<128x128xf32>, vector<8x128xf32> -> vector<8x128xf32>
    %22 = arith.addf %18, %21 : vector<8x128xf32>
    %23 = math.tanh %22 : vector<8x128xf32>
    %24 = arith.mulf %16, %1 : vector<8x128xf32>
    %cst_14 = arith.constant 1.000000e+00 : f32
    %25 = vector.broadcast %cst_14 : f32 to vector<8x128xf32>
    %26 = arith.subf %25, %16 : vector<8x128xf32>
    %27 = arith.mulf %26, %23 : vector<8x128xf32>
    %28 = arith.addf %24, %27 : vector<8x128xf32>
    %c0_15 = arith.constant 0 : index
    %c0_16 = arith.constant 0 : index
    %29 = vector.load %arg7[%c0_15, %c0_16] : memref<8x128xf32, #tpu.memory_space<vmem>>, vector<8x128xf32>
    tpu.vector_store %arg7[%c0_15, %c0_16], %28 {strides = array<i32>} : memref<8x128xf32, #tpu.memory_space<vmem>>, vector<8x128xf32>,
    return
  }
  func.func @transform_0(%arg0: i32) -> (i32, i32) {
    %c0_i32 = arith.constant 0 : i32
    %c0_i32_0 = arith.constant 0 : i32
    return %arg0, %c0_i32 : i32, i32
  }
  func.func @transform_1(%arg0: i32) -> (i32, i32) {
    %c0_i32 = arith.constant 0 : i32
    %c0_i32_0 = arith.constant 0 : i32
    return %arg0, %c0_i32 : i32, i32
  }
  func.func @transform_2(%arg0: i32) -> (i32, i32) {
    %c0_i32 = arith.constant 0 : i32
    %c0_i32_0 = arith.constant 0 : i32
    %c0_i32_1 = arith.constant 0 : i32
    return %c0_i32, %c0_i32_0 : i32, i32
  }
  func.func @transform_3(%arg0: i32) -> (i32, i32) {
    %c0_i32 = arith.constant 0 : i32
    %c0_i32_0 = arith.constant 0 : i32
    %c0_i32_1 = arith.constant 0 : i32
    return %c0_i32, %c0_i32_0 : i32, i32
  }
  func.func @transform_4(%arg0: i32) -> (i32, i32) {
    %c0_i32 = arith.constant 0 : i32
    %c0_i32_0 = arith.constant 0 : i32
    %c0_i32_1 = arith.constant 0 : i32
    return %c0_i32, %c0_i32_0 : i32, i32
  }
  func.func @transform_5(%arg0: i32) -> (i32, i32) {
    %c0_i32 = arith.constant 0 : i32
    %c0_i32_0 = arith.constant 0 : i32
    %c0_i32_1 = arith.constant 0 : i32
    return %c0_i32, %c0_i32_0 : i32, i32
  }
  func.func @transform_6(%arg0: i32) -> (i32, i32) {
    %c0_i32 = arith.constant 0 : i32
    %c0_i32_0 = arith.constant 0 : i32
    return %arg0, %c0_i32 : i32, i32
  }
}

module attributes {stable_mosaic.version = 11 : i64} {
  func.func @tgcn_cell_kernel(%arg0: i32, %arg1: memref<8x8xf32, #tpu.memory_space<vmem>>, %arg2: memref<8x128xf32, #tpu.memory_space<vmem>>, %arg3: memref<8x384xf32, #tpu.memory_space<vmem>>, %arg4: memref<128x256xf32, #tpu.memory_space<vmem>>, %arg5: memref<128x128xf32, #tpu.memory_space<vmem>>, %arg6: memref<1x384xf32, #tpu.memory_space<vmem>>, %arg7: memref<8x128xf32, #tpu.memory_space<vmem>>) attributes {dimension_semantics = [#tpu.dimension_semantics<parallel>], iteration_bounds = array<i64: 4>, scalar_prefetch = 0 : i64, scratch_operands = 0 : i64, tpu.core_type = #tpu.core_type<tc>, window_params = [{transform_indices = @transform_0, window_bounds = array<i64: 8, 8>}, {transform_indices = @transform_1, window_bounds = array<i64: 8, 128>}, {pipeline_mode = #tpu.pipeline_mode<synchronous>, transform_indices = @transform_2, window_bounds = array<i64: 8, 384>}, {pipeline_mode = #tpu.pipeline_mode<synchronous>, transform_indices = @transform_3, window_bounds = array<i64: 128, 256>}, {pipeline_mode = #tpu.pipeline_mode<synchronous>, transform_indices = @transform_4, window_bounds = array<i64: 128, 128>}, {pipeline_mode = #tpu.pipeline_mode<synchronous>, transform_indices = @transform_5, window_bounds = array<i64: 1, 384>}, {transform_indices = @transform_6, window_bounds = array<i64: 8, 128>}]} {
    %c0 = arith.constant 0 : index
    %c0_0 = arith.constant 0 : index
    %0 = vector.load %arg1[%c0, %c0_0] : memref<8x8xf32, #tpu.memory_space<vmem>>, vector<8x8xf32>
    %c0_1 = arith.constant 0 : index
    %c0_2 = arith.constant 0 : index
    %1 = vector.load %arg2[%c0_1, %c0_2] : memref<8x128xf32, #tpu.memory_space<vmem>>, vector<8x128xf32>
    %c0_3 = arith.constant 0 : index
    %c0_4 = arith.constant 0 : index
    %2 = vector.load %arg3[%c0_3, %c0_4] : memref<8x384xf32, #tpu.memory_space<vmem>>, vector<8x384xf32>
    %cst = arith.constant dense<0.000000e+00> : vector<8x384xf32>
    %3 = tpu.matmul %0, %2, %cst {dimension_numbers = #tpu.dot_dimension_numbers<[1], [0], [0], [1], [0, 0, 1, 1], [], []>} : vector<8x8xf32>, vector<8x384xf32>, vector<8x384xf32> -> vector<8x384xf32>
    %c0_5 = arith.constant 0 : index
    %c0_6 = arith.constant 0 : index
    %4 = vector.load %arg6[%c0_5, %c0_6] : memref<1x384xf32, #tpu.memory_space<vmem>>, vector<1x384xf32>
    %5 = vector.broadcast %4 : vector<1x384xf32> to vector<8x384xf32>
    %6 = arith.addf %3, %5 : vector<8x384xf32>
    %c0_7 = arith.constant 0 : index
    %c0_8 = arith.constant 0 : index
    %7 = vector.load %arg4[%c0_7, %c0_8] : memref<128x256xf32, #tpu.memory_space<vmem>>, vector<128x256xf32>
    %cst_9 = arith.constant dense<0.000000e+00> : vector<8x256xf32>
    %8 = tpu.matmul %1, %7, %cst_9 {dimension_numbers = #tpu.dot_dimension_numbers<[1], [0], [0], [1], [0, 0, 1, 1], [], []>} : vector<8x128xf32>, vector<128x256xf32>, vector<8x256xf32> -> vector<8x256xf32>
    %9 = vector.extract_strided_slice %6 {offsets = [0, 0], sizes = [8, 256], strides = [1, 1]} : vector<8x384xf32> to vector<8x256xf32>
    %10 = arith.addf %9, %8 : vector<8x256xf32>
    %11 = arith.negf %10 : vector<8x256xf32>
    %12 = math.exp %11 : vector<8x256xf32>
    %cst_10 = arith.constant 1.000000e+00 : f32
    %13 = vector.broadcast %cst_10 : f32 to vector<8x256xf32>
    %14 = arith.addf %13, %12 : vector<8x256xf32>
    %15 = arith.divf %13, %14 : vector<8x256xf32>
    %16 = vector.extract_strided_slice %15 {offsets = [0, 0], sizes = [8, 128], strides = [1, 1]} : vector<8x256xf32> to vector<8x128xf32>
    %17 = vector.extract_strided_slice %15 {offsets = [0, 128], sizes = [8, 128], strides = [1, 1]} : vector<8x256xf32> to vector<8x128xf32>
    %18 = vector.extract_strided_slice %6 {offsets = [0, 256], sizes = [8, 128], strides = [1, 1]} : vector<8x384xf32> to vector<8x128xf32>
    %19 = arith.mulf %17, %1 : vector<8x128xf32>
    %c0_11 = arith.constant 0 : index
    %c0_12 = arith.constant 0 : index
    %20 = vector.load %arg5[%c0_11, %c0_12] : memref<128x128xf32, #tpu.memory_space<vmem>>, vector<128x128xf32>
    %cst_13 = arith.constant dense<0.000000e+00> : vector<8x128xf32>
    %21 = tpu.matmul %19, %20, %cst_13 {dimension_numbers = #tpu.dot_dimension_numbers<[1], [0], [0], [1], [0, 0, 1, 1], [], []>} : vector<8x128xf32>, vector<128x128xf32>, vector<8x128xf32> -> vector<8x128xf32>
    %22 = arith.addf %18, %21 : vector<8x128xf32>
    %23 = math.tanh %22 : vector<8x128xf32>
    %24 = arith.mulf %16, %1 : vector<8x128xf32>
    %cst_14 = arith.constant 1.000000e+00 : f32
    %25 = vector.broadcast %cst_14 : f32 to vector<8x128xf32>
    %26 = arith.subf %25, %16 : vector<8x128xf32>
    %27 = arith.mulf %26, %23 : vector<8x128xf32>
    %28 = arith.addf %24, %27 : vector<8x128xf32>
    %c0_15 = arith.constant 0 : index
    %c0_16 = arith.constant 0 : index
    %29 = vector.load %arg7[%c0_15, %c0_16] : memref<8x128xf32, #tpu.memory_space<vmem>>, vector<8x128xf32>
    tpu.vector_store %arg7[%c0_15, %c0_16], %28 {strides = array<i32>} : memref<8x128xf32, #tpu.memory_space<vmem>>, vector<8x128xf32>,
    return
  }
  func.func @transform_0(%arg0: i32) -> (i32, i32) {
    %c0_i32 = arith.constant 0 : i32
    %c0_i32_0 = arith.constant 0 : i32
    return %arg0, %c0_i32 : i32, i32
  }
  func.func @transform_1(%arg0: i32) -> (i32, i32) {
    %c0_i32 = arith.constant 0 : i32
    %c0_i32_0 = arith.constant 0 : i32
    return %arg0, %c0_i32 : i32, i32
  }
  func.func @transform_2(%arg0: i32) -> (i32, i32) {
    %c0_i32 = arith.constant 0 : i32
    %c0_i32_0 = arith.constant 0 : i32
    %c0_i32_1 = arith.constant 0 : i32
    return %c0_i32, %c0_i32_0 : i32, i32
  }
  func.func @transform_3(%arg0: i32) -> (i32, i32) {
    %c0_i32 = arith.constant 0 : i32
    %c0_i32_0 = arith.constant 0 : i32
    %c0_i32_1 = arith.constant 0 : i32
    return %c0_i32, %c0_i32_0 : i32, i32
  }
  func.func @transform_4(%arg0: i32) -> (i32, i32) {
    %c0_i32 = arith.constant 0 : i32
    %c0_i32_0 = arith.constant 0 : i32
    %c0_i32_1 = arith.constant 0 : i32
    return %c0_i32, %c0_i32_0 : i32, i32
  }
  func.func @transform_5(%arg0: i32) -> (i32, i32) {
    %c0_i32 = arith.constant 0 : i32
    %c0_i32_0 = arith.constant 0 : i32
    %c0_i32_1 = arith.constant 0 : i32
    return %c0_i32, %c0_i32_0 : i32, i32
  }
  func.func @transform_6(%arg0: i32) -> (i32, i32) {
    %c0_i32 = arith.constant 0 : i32
    %c0_i32_0 = arith.constant 0 : i32
    return %arg0, %c0_i32 : i32, i32
  }
}

</mosaic_0001>

<llo_original>
// kernel: _tgcn_cell_impl.1
$region0: #{_tgcn_cell_impl.1}
  #allocation0 [shape = 'u32[]', space=smem, size = 0x4, offset = 0x4, fixed_abs, tag = 'smem constant byte address 0x4 - core index']
  #allocation1 [shape = 'u32[72,128]{1,0:T(1,128)}', space=vmem, size = 0x9000, scoped, tag = 'internal scratch']
  %s0 = inlined_call_operand.vmem [shape: f32[32,8], index: 0, kind: input, shape index: {}]
  %s1 = inlined_call_operand.vmem [shape: f32[32,128], index: 1, kind: input, shape index: {}]
  %s2 = inlined_call_operand.vmem [shape: f32[8,384], index: 2, kind: input, shape index: {}]
  %s3 = inlined_call_operand.hbm [shape: f32[128,256], index: 3, kind: input, shape index: {}]
  %s4 = inlined_call_operand.hbm [shape: f32[128,128], index: 4, kind: input, shape index: {}]
  %s5 = inlined_call_operand.vmem [shape: f32[1,384], index: 5, kind: input, shape index: {}]
  %s6 = inlined_call_operand.hbm [shape: f32[32,128], index: 6, kind: output, shape index: {}]
  %s7 = sld [smem:[#allocation0]]
  $region65: #{_tgcn_cell_impl.1} parent=0
    _
  %s9 = ssub.s32 1, %s7
  %s10 = scalar_select 0, %s9, %s7
  $region1: #{_tgcn_cell_impl.1} parent=0
    #allocation2 [shape = 'u8[131072]{0}', space=vmem, size = 0x20000, scoped, tag = 'input window, operand 3, single buffered']
    #allocation3 [shape = 's32[2]{0}', space=sflag, size = 0x8, scoped, tag = 'scoped memory for _tgcn_cell_impl.1']
    #allocation4 [shape = 's32[2]{0}', space=sflag, size = 0x8, scoped, tag = 'scoped memory for _tgcn_cell_impl.1']
    #allocation5 [shape = 'u8[65536]{0}', space=vmem, size = 0x10000, scoped, tag = 'input window, operand 4, single buffered']
    #allocation6 [shape = 's32[1]{0}', space=sflag, size = 0x4, scoped, tag = 'scoped memory for _tgcn_cell_impl.1']
    #allocation7 [shape = 'u8[8192]{0}', space=vmem, size = 0x2000, scoped, tag = 'output window, operand 0']
    %11 = vsyncpa [#allocation3], 0
    %12 = vsyncpa [#allocation6], 0
    %13 = vsyncpa [#allocation4], 0
    %s14 = scalar_lea.sflag [#allocation4], 1
    %15 = vsyncpa %s14, 0
    loop: start=0, step=1, limit=6
    $region2: #{_tgcn_cell_impl.1} parent=1 // loop_pre_header
      _
    $region3: #{_tgcn_cell_impl.1} parent=1 // loop_header
      %s17 = sphi 0, %s21
      %p18 = scmp.ge.s32.totalorder %s17, 6
      %s27 = sphi 0, %s29
      %s30 = sphi 0, %s27
      %s31 = sphi 0, %s30
      %s47 = sphi 0, %s31
      %s53 = sphi 0, %s55
      %s56 = sphi 0, %s53
      %s57 = sphi 0, %s56
      %s73 = sphi 0, %s57
      %s77 = sphi 0, %s77
      %s79 = sphi 0, %s77
      %s80 = sphi 0, %s79
      %s94 = sphi 0, %s80
      %s98 = sphi 0, %s98
      %s100 = sphi 0, %s98
      %s101 = sphi 0, %s100
      %s115 = sphi 0, %s101
      %s119 = sphi 0, %s119
      %s121 = sphi 0, %s119
      %s122 = sphi 0, %s121
      %s136 = sphi 0, %s122
      %s140 = sphi 0, %s140
      %s142 = sphi 0, %s140
      %s143 = sphi 0, %s142
      %s157 = sphi 0, %s143
      %s163 = sphi 0, %s165
      %s166 = sphi 0, %s163
      %s167 = sphi 0, %s166
      %s183 = sphi 0, %s167
    $region4: #{_tgcn_cell_impl.1} parent=1 // loop_header_branch
      %20 = sbr.rel (%p18) target = $region8
    $region5: #{_tgcn_cell_impl.1} parent=1 // loop_body
      %s22 = ssub.s32 %s17, 1
      %s23 = ssub.s32 %s17, 2
      %s24 = sadd.s32 %s17, 1
      %s25 = ssub.s32 %s17, %s24
      %p26 = scmp.eq.s32.totalorder %s25, 0
      %s28 = sadd.s32 %s27, 1
      %s29 = scalar_select %p26, %s27, %s28
      %p32 = pneg %p26
      %p33 = scmp.eq.s32.totalorder %s17, 3
      %p34 = por %p32, %p33
      %p35 = scmp.ne.s32.totalorder %s27, %s30
      %p36 = scmp.eq.s32.totalorder %s17, 0
      %p37 = por %p35, %p36
      %p38 = scmp.ne.s32.totalorder %s27, %s30
      %p39 = scmp.eq.s32.totalorder %s22, 3
      %p40 = por %p38, %p39
      %p41 = scmp.ne.s32.totalorder %s30, %s31
      %p42 = scmp.eq.s32.totalorder %s22, 0
      %p43 = por %p41, %p42
      %p44 = scmp.ne.s32.totalorder %s30, %s31
      %p45 = scmp.eq.s32.totalorder %s23, 3
      %p46 = por %p44, %p45
      %p48 = scmp.ne.s32.totalorder %s31, %s47
      %p49 = scmp.eq.s32.totalorder %s23, 0
      %p50 = por %p48, %p49
      %s51 = ssub.s32 %s17, %s24
      %p52 = scmp.eq.s32.totalorder %s51, 0
      %s54 = sadd.s32 %s53, 1
      %s55 = scalar_select %p52, %s53, %s54
      %p58 = pneg %p52
      %p59 = scmp.eq.s32.totalorder %s17, 3
      %p60 = por %p58, %p59
      %p61 = scmp.ne.s32.totalorder %s53, %s56
      %p62 = scmp.eq.s32.totalorder %s17, 0
      %p63 = por %p61, %p62
      %p64 = scmp.ne.s32.totalorder %s53, %s56
      %p65 = scmp.eq.s32.totalorder %s22, 3
      %p66 = por %p64, %p65
      %p67 = scmp.ne.s32.totalorder %s56, %s57
      %p68 = scmp.eq.s32.totalorder %s22, 0
      %p69 = por %p67, %p68
      %p70 = scmp.ne.s32.totalorder %s56, %s57
      %p71 = scmp.eq.s32.totalorder %s23, 3
      %p72 = por %p70, %p71
      %p74 = scmp.ne.s32.totalorder %s57, %s73
      %p75 = scmp.eq.s32.totalorder %s23, 0
      %p76 = por %p74, %p75
      %s78 = sadd.s32 %s77, 1
      %p81 = scmp.eq.s32.totalorder %s17, 3
      %p82 = scmp.ne.s32.totalorder %s77, %s79
      %p83 = scmp.eq.s32.totalorder %s17, 0
      %p84 = por %p82, %p83
      %p85 = scmp.ne.s32.totalorder %s77, %s79
      %p86 = scmp.eq.s32.totalorder %s22, 3
      %p87 = por %p85, %p86
      %p88 = scmp.ne.s32.totalorder %s79, %s80
      %p89 = scmp.eq.s32.totalorder %s22, 0
      %p90 = por %p88, %p89
      %p91 = scmp.ne.s32.totalorder %s79, %s80
      %p92 = scmp.eq.s32.totalorder %s23, 3
      %p93 = por %p91, %p92
      %p95 = scmp.ne.s32.totalorder %s80, %s94
      %p96 = scmp.eq.s32.totalorder %s23, 0
      %p97 = por %p95, %p96
      %s99 = sadd.s32 %s98, 1
      %p102 = scmp.eq.s32.totalorder %s17, 3
      %p103 = scmp.ne.s32.totalorder %s98, %s100
      %p104 = scmp.eq.s32.totalorder %s17, 0
      %p105 = por %p103, %p104
      %p106 = scmp.ne.s32.totalorder %s98, %s100
      %p107 = scmp.eq.s32.totalorder %s22, 3
      %p108 = por %p106, %p107
      %p109 = scmp.ne.s32.totalorder %s100, %s101
      %p110 = scmp.eq.s32.totalorder %s22, 0
      %p111 = por %p109, %p110
      %p112 = scmp.ne.s32.totalorder %s100, %s101
      %p113 = scmp.eq.s32.totalorder %s23, 3
      %p114 = por %p112, %p113
      %p116 = scmp.ne.s32.totalorder %s101, %s115
      %p117 = scmp.eq.s32.totalorder %s23, 0
      %p118 = por %p116, %p117
      %s120 = sadd.s32 %s119, 1
      %p123 = scmp.eq.s32.totalorder %s17, 3
      %p124 = scmp.ne.s32.totalorder %s119, %s121
      %p125 = scmp.eq.s32.totalorder %s17, 0
      %p126 = por %p124, %p125
      %p127 = scmp.ne.s32.totalorder %s119, %s121
      %p128 = scmp.eq.s32.totalorder %s22, 3
      %p129 = por %p127, %p128
      %p130 = scmp.ne.s32.totalorder %s121, %s122
      %p131 = scmp.eq.s32.totalorder %s22, 0
      %p132 = por %p130, %p131
      %p133 = scmp.ne.s32.totalorder %s121, %s122
      %p134 = scmp.eq.s32.totalorder %s23, 3
      %p135 = por %p133, %p134
      %p137 = scmp.ne.s32.totalorder %s122, %s136
      %p138 = scmp.eq.s32.totalorder %s23, 0
      %p139 = por %p137, %p138
      %s141 = sadd.s32 %s140, 1
      %p144 = scmp.eq.s32.totalorder %s17, 3
      %p145 = scmp.ne.s32.totalorder %s140, %s142
      %p146 = scmp.eq.s32.totalorder %s17, 0
      %p147 = por %p145, %p146
      %p148 = scmp.ne.s32.totalorder %s140, %s142
      %p149 = scmp.eq.s32.totalorder %s22, 3
      %p150 = por %p148, %p149
      %p151 = scmp.ne.s32.totalorder %s142, %s143
      %p152 = scmp.eq.s32.totalorder %s22, 0
      %p153 = por %p151, %p152
      %p154 = scmp.ne.s32.totalorder %s142, %s143
      %p155 = scmp.eq.s32.totalorder %s23, 3
      %p156 = por %p154, %p155
      %p158 = scmp.ne.s32.totalorder %s143, %s157
      %p159 = scmp.eq.s32.totalorder %s23, 0
      %p160 = por %p158, %p159
      %s161 = ssub.s32 %s17, %s24
      %p162 = scmp.eq.s32.totalorder %s161, 0
      %s164 = sadd.s32 %s163, 1
      %s165 = scalar_select %p162, %s163, %s164
      %p168 = pneg %p162
      %p169 = scmp.eq.s32.totalorder %s17, 3
      %p170 = por %p168, %p169
      %p171 = scmp.ne.s32.totalorder %s163, %s166
      %p172 = scmp.eq.s32.totalorder %s17, 0
      %p173 = por %p171, %p172
      %p174 = scmp.ne.s32.totalorder %s163, %s166
      %p175 = scmp.eq.s32.totalorder %s22, 3
      %p176 = por %p174, %p175
      %p177 = scmp.ne.s32.totalorder %s166, %s167
      %p178 = scmp.eq.s32.totalorder %s22, 0
      %p179 = por %p177, %p178
      %p180 = scmp.ne.s32.totalorder %s166, %s167
      %p181 = scmp.eq.s32.totalorder %s23, 3
      %p182 = por %p180, %p181
      %p184 = scmp.ne.s32.totalorder %s167, %s183
      %p185 = scmp.eq.s32.totalorder %s23, 0
      %p186 = por %p184, %p185
      %p187 = scmp.le.s32.totalorder 1, %s17
      %p188 = scmp.lt.s32.totalorder %s17, 5
      %p189 = pnand %p187, %p188
      %p190 = pneg %p189
      // Predicated region
      $region9: #{_tgcn_cell_impl.1} parent=5 // pred_check
        _
      $region10: #{_tgcn_cell_impl.1} parent=5 // pred_check_branch
        %192 = sbr.rel (%p189) target = $region12
      $region11: #{_tgcn_cell_impl.1} parent=5 // pred_region
        %s193 = ssub.s32 %s17, 1
        // Predicated region
        $region13: #{_tgcn_cell_impl.1} parent=11 // pred_check
          %p194 = pneg %p90
        $region14: #{_tgcn_cell_impl.1} parent=11 // pred_check_branch
          %196 = sbr.rel (%p194) target = $region16
        $region15: #{_tgcn_cell_impl.1} parent=11 // pred_region
          _
        $region16: #{_tgcn_cell_impl.1} parent=11 // pred_fallthru
          _
        // Predicated region
        $region17: #{_tgcn_cell_impl.1} parent=11 // pred_check
          %p197 = pneg %p111
        $region18: #{_tgcn_cell_impl.1} parent=11 // pred_check_branch
          %199 = sbr.rel (%p197) target = $region20
        $region19: #{_tgcn_cell_impl.1} parent=11 // pred_region
          %201 = vsyncadd [#allocation3], 0
          %s202 = sshll.u32 %s3, 4
          %s203 = int_to_ptr.hbm [resolvable:$true] %s202
          %s204 = sshll.u32 [#allocation2], 4
          %s205 = int_to_ptr.vmem [resolvable:$true] %s204
          %210 = dma.hbm_to_vmem [thread:$0]  %s203, 4096, %s205, [#allocation3], 256, 256, 16
        $region20: #{_tgcn_cell_impl.1} parent=11 // pred_fallthru
          _
        // Predicated region
        $region21: #{_tgcn_cell_impl.1} parent=11 // pred_check
          %p211 = pneg %p132
        $region22: #{_tgcn_cell_impl.1} parent=11 // pred_check_branch
          %213 = sbr.rel (%p211) target = $region24
        $region23: #{_tgcn_cell_impl.1} parent=11 // pred_region
          %215 = vsyncadd [#allocation6], 0
          %s216 = sshll.u32 %s4, 4
          %s217 = int_to_ptr.hbm [resolvable:$true] %s216
          %s218 = sshll.u32 [#allocation5], 4
          %s219 = int_to_ptr.vmem [resolvable:$true] %s218
          %224 = dma.hbm_to_vmem [thread:$0]  %s217, 2048, %s219, [#allocation6], 128, 128, 8
        $region24: #{_tgcn_cell_impl.1} parent=11 // pred_fallthru
          _
        // Predicated region
        $region25: #{_tgcn_cell_impl.1} parent=11 // pred_check
          %p225 = pneg %p153
        $region26: #{_tgcn_cell_impl.1} parent=11 // pred_check_branch
          %227 = sbr.rel (%p225) target = $region28
        $region27: #{_tgcn_cell_impl.1} parent=11 // pred_region
          _
        $region28: #{_tgcn_cell_impl.1} parent=11 // pred_fallthru
          _
      $region12: #{_tgcn_cell_impl.1} parent=5 // pred_fallthru
        _
      %p228 = scmp.lt.s32.totalorder %s17, 4
      // Predicated region
      $region29: #{_tgcn_cell_impl.1} parent=5 // pred_check
        %p229 = pneg %p228
      $region30: #{_tgcn_cell_impl.1} parent=5 // pred_check_branch
        %231 = sbr.rel (%p229) target = $region32
      $region31: #{_tgcn_cell_impl.1} parent=5 // pred_region
        // Predicated region
        $region33: #{_tgcn_cell_impl.1} parent=31 // pred_check
          %p232 = pneg %p37
        $region34: #{_tgcn_cell_impl.1} parent=31 // pred_check_branch
          %234 = sbr.rel (%p232) target = $region36
        $region35: #{_tgcn_cell_impl.1} parent=31 // pred_region
          %p235 = scmp.lt.s32.totalorder %s17, 3
          %s236 = scalar_select %p235, %s17, 3
          %s237 = smul.addr %s236, 8
          %s238 = scalar_lea.vmem %s0, %s237
        $region36: #{_tgcn_cell_impl.1} parent=31 // pred_fallthru
          _
        // Predicated region
        $region37: #{_tgcn_cell_impl.1} parent=31 // pred_check
          %p239 = pneg %p63
        $region38: #{_tgcn_cell_impl.1} parent=31 // pred_check_branch
          %241 = sbr.rel (%p239) target = $region40
        $region39: #{_tgcn_cell_impl.1} parent=31 // pred_region
          %p242 = scmp.lt.s32.totalorder %s17, 3
          %s243 = scalar_select %p242, %s17, 3
          %s244 = smul.addr %s243, 8
          %s245 = scalar_lea.vmem %s1, %s244
        $region40: #{_tgcn_cell_impl.1} parent=31 // pred_fallthru
          _
      $region32: #{_tgcn_cell_impl.1} parent=5 // pred_fallthru
        _
      %p246 = scmp.le.s32.totalorder 1, %s17
      %p247 = scmp.lt.s32.totalorder %s17, 5
      %p248 = pnand %p246, %p247
      %p249 = pneg %p248
      // Predicated region
      $region41: #{_tgcn_cell_impl.1} parent=5 // pred_check
        _
      $region42: #{_tgcn_cell_impl.1} parent=5 // pred_check_branch
        %251 = sbr.rel (%p248) target = $region44
      $region43: #{_tgcn_cell_impl.1} parent=5 // pred_region
        %s252 = ssub.s32 %s17, 1
        // Predicated region
        $region45: #{_tgcn_cell_impl.1} parent=43 // pred_check
          %p253 = pneg %p111
        $region46: #{_tgcn_cell_impl.1} parent=43 // pred_check_branch
          %255 = sbr.rel (%p253) target = $region48
        $region47: #{_tgcn_cell_impl.1} parent=43 // pred_region
          %257 = dma.done [#allocation3], 4096
        $region48: #{_tgcn_cell_impl.1} parent=43 // pred_fallthru
          _
        // Predicated region
        $region49: #{_tgcn_cell_impl.1} parent=43 // pred_check
          %p258 = pneg %p132
        $region50: #{_tgcn_cell_impl.1} parent=43 // pred_check_branch
          %260 = sbr.rel (%p258) target = $region52
        $region51: #{_tgcn_cell_impl.1} parent=43 // pred_region
          %262 = dma.done [#allocation6], 2048
        $region52: #{_tgcn_cell_impl.1} parent=43 // pred_fallthru
          _
        %p263 = scmp.lt.s32.totalorder %s22, 3
        %s264 = scalar_select %p263, %s22, 3
        %s265 = smul.addr %s264, 8
        %s266 = scalar_lea.vmem %s0, %s265
        %p267 = pneg %p43
        %p268 = pneg %p40
        %p269 = scmp.lt.s32.totalorder %s22, 3
        %s270 = scalar_select %p269, %s22, 3
        %s271 = smul.addr %s270, 8
        %s272 = scalar_lea.vmem %s1, %s271
        %p273 = pneg %p69
        %p274 = pneg %p66
        %p275 = pneg %p90
        %p276 = pneg %p87
        %p277 = pneg %p111
        %p278 = pneg %p108
        %p279 = pneg %p132
        %p280 = pneg %p129
        %p281 = pneg %p153
        %p282 = pneg %p150
        %p283 = pneg %p179
        %p284 = pneg %p176
        %s285 = sand.u32 %s166, 1
        %s286 = scalar_lea.sflag [#allocation4], %s285
        %s287 = sand.u32 %s166, 1
        %s288 = smul.addr %s287, 8
        %s289 = scalar_lea.vmem [#allocation7], %s288
        %p290 = scmp.lt.s32.totalorder %s22, 3
        %s291 = scalar_select %p290, %s22, 3
        %s292 = smul.addr %s291, 8
        %s293 = scalar_lea.vmem %s0, %s292
        %p294 = scmp.lt.s32.totalorder %s22, 3
        %s295 = scalar_select %p294, %s22, 3
        %s296 = smul.addr %s295, 8
        %s297 = scalar_lea.vmem %s1, %s296
        %v298 = vld [vmem:[%s293] sm:$0xff]
        %v299 = vld [vmem:[%s297] sm:$0xff]
        %v300 = vld [vmem:[%s2] sm:$0xff]
        %v301 = vld [vmem:[%s2 + $0x8] sm:$0xff]
        %v302 = vld [vmem:[%s2 + $0x10] sm:$0xff]
        %v303 = vld [vmem:[%s5] sm:$0x7]
        %v305 = vperm.slane %v303, 0
        %v306 = vperm.slane %v303, 1
        %v307 = vperm.slane %v303, 2
        %vm311 = vcmask 64512
        %v313 = vsel %vm311, %v298, 0
        %315 = vmatpush.msra.mxu0 0.0
        %316 = vmatpush.msra.mxu0 0.0
        %317 = vmatpush.msra.mxu0 0.0
        %318 = vmatpush.msra.mxu0 0.0
        %319 = vmatpush.msra.mxu0 0.0
        %320 = vmatpush.msra.mxu0 0.0
        %321 = vmatpush.msra.mxu0 0.0
        %322 = vmatpush.msra.mxu0 0.0
        %323 = vmatpush.msra.mxu0 0.0
        %324 = vmatpush.msra.mxu0 0.0
        %325 = vmatpush.msra.mxu0 0.0
        %326 = vmatpush.msra.mxu0 0.0
        %327 = vmatpush.msra.mxu0 0.0
        %328 = vmatpush.msra.mxu0 0.0
        %329 = vmatpush.msra.mxu0 0.0
        %330 = vmatpush.msra.mxu0 %v300
        %331 = vmatmul.f32.gmra.mxu0 %v313
        %v332 = vpop.f32.mrf.mxu0
        %v333 = vadd.f32 %v305, %v332
        %334 = vdwg.mxu0
        %335 = vmatpush.msra.mxu0 0.0
        %336 = vmatpush.msra.mxu0 0.0
        %337 = vmatpush.msra.mxu0 0.0
        %338 = vmatpush.msra.mxu0 0.0
        %339 = vmatpush.msra.mxu0 0.0
        %340 = vmatpush.msra.mxu0 0.0
        %341 = vmatpush.msra.mxu0 0.0
        %342 = vmatpush.msra.mxu0 0.0
        %343 = vmatpush.msra.mxu0 0.0
        %344 = vmatpush.msra.mxu0 0.0
        %345 = vmatpush.msra.mxu0 0.0
        %346 = vmatpush.msra.mxu0 0.0
        %347 = vmatpush.msra.mxu0 0.0
        %348 = vmatpush.msra.mxu0 0.0
        %349 = vmatpush.msra.mxu0 0.0
        %350 = vmatpush.msra.mxu0 %v301
        %351 = vmatmul.f32.gmra.mxu0 %v313
        %v352 = vpop.f32.mrf.mxu0
        %v353 = vadd.f32 %v306, %v352
        %354 = vdwg.mxu0
        %355 = vmatpush.msra.mxu0 0.0
        %356 = vmatpush.msra.mxu0 0.0
        %357 = vmatpush.msra.mxu0 0.0
        %358 = vmatpush.msra.mxu0 0.0
        %359 = vmatpush.msra.mxu0 0.0
        %360 = vmatpush.msra.mxu0 0.0
        %361 = vmatpush.msra.mxu0 0.0
        %362 = vmatpush.msra.mxu0 0.0
        %363 = vmatpush.msra.mxu0 0.0
        %364 = vmatpush.msra.mxu0 0.0
        %365 = vmatpush.msra.mxu0 0.0
        %366 = vmatpush.msra.mxu0 0.0
        %367 = vmatpush.msra.mxu0 0.0
        %368 = vmatpush.msra.mxu0 0.0
        %369 = vmatpush.msra.mxu0 0.0
        %370 = vmatpush.msra.mxu0 %v302
        %371 = vmatmul.f32.gmra.mxu0 %v313
        %v372 = vpop.f32.mrf.mxu0
        %v373 = vadd.f32 %v307, %v372
        %374 = vdwg.mxu0
        %v375 = vld [vmem:[#allocation2] sm:$0xff]
        %v376 = vld [vmem:[#allocation2 + $0x8] sm:$0xff]
        %v377 = vld [vmem:[#allocation2 + $0x10] sm:$0xff]
        %v378 = vld [vmem:[#allocation2 + $0x18] sm:$0xff]
        %v379 = vld [vmem:[#allocation2 + $0x20] sm:$0xff]
        %v380 = vld [vmem:[#allocation2 + $0x28] sm:$0xff]
        %v381 = vld [vmem:[#allocation2 + $0x30] sm:$0xff]
        %v382 = vld [vmem:[#allocation2 + $0x38] sm:$0xff]
        %v383 = vld [vmem:[#allocation2 + $0x40] sm:$0xff]
        %v384 = vld [vmem:[#allocation2 + $0x48] sm:$0xff]
        %v385 = vld [vmem:[#allocation2 + $0x50] sm:$0xff]
        %v386 = vld [vmem:[#allocation2 + $0x58] sm:$0xff]
        %v387 = vld [vmem:[#allocation2 + $0x60] sm:$0xff]
        %v388 = vld [vmem:[#allocation2 + $0x68] sm:$0xff]
        %v389 = vld [vmem:[#allocation2 + $0x70] sm:$0xff]
        %v390 = vld [vmem:[#allocation2 + $0x78] sm:$0xff]
        %v391 = vld [vmem:[#allocation2 + $0x80] sm:$0xff]
        %v392 = vld [vmem:[#allocation2 + $0x88] sm:$0xff]
        %v393 = vld [vmem:[#allocation2 + $0x90] sm:$0xff]
        %v394 = vld [vmem:[#allocation2 + $0x98] sm:$0xff]
        %v395 = vld [vmem:[#allocation2 + $0xa0] sm:$0xff]
        %v396 = vld [vmem:[#allocation2 + $0xa8] sm:$0xff]
        %v397 = vld [vmem:[#allocation2 + $0xb0] sm:$0xff]
        %v398 = vld [vmem:[#allocation2 + $0xb8] sm:$0xff]
        %v399 = vld [vmem:[#allocation2 + $0xc0] sm:$0xff]
        %v400 = vld [vmem:[#allocation2 + $0xc8] sm:$0xff]
        %v401 = vld [vmem:[#allocation2 + $0xd0] sm:$0xff]
        %v402 = vld [vmem:[#allocation2 + $0xd8] sm:$0xff]
        %v403 = vld [vmem:[#allocation2 + $0xe0] sm:$0xff]
        %v404 = vld [vmem:[#allocation2 + $0xe8] sm:$0xff]
        %v405 = vld [vmem:[#allocation2 + $0xf0] sm:$0xff]
        %v406 = vld [vmem:[#allocation2 + $0xf8] sm:$0xff]
        %407 = vmatpush.msra.mxu0 %v405
        %408 = vmatpush.msra.mxu0 %v403
        %409 = vmatpush.msra.mxu0 %v401
        %410 = vmatpush.msra.mxu0 %v399
        %411 = vmatpush.msra.mxu0 %v397
        %412 = vmatpush.msra.mxu0 %v395
        %413 = vmatpush.msra.mxu0 %v393
        %414 = vmatpush.msra.mxu0 %v391
        %415 = vmatpush.msra.mxu0 %v389
        %416 = vmatpush.msra.mxu0 %v387
        %417 = vmatpush.msra.mxu0 %v385
        %418 = vmatpush.msra.mxu0 %v383
        %419 = vmatpush.msra.mxu0 %v381
        %420 = vmatpush.msra.mxu0 %v379
        %421 = vmatpush.msra.mxu0 %v377
        %422 = vmatpush.msra.mxu0 %v375
        %423 = vmatmul.f32.gmra.mxu0 %v299
        %v424 = vpop.f32.mrf.mxu0
        %v425 = vadd.f32 0.0, %v424
        %426 = vdwg.mxu0
        %427 = vmatpush.msra.mxu0 %v406
        %428 = vmatpush.msra.mxu0 %v404
        %429 = vmatpush.msra.mxu0 %v402
        %430 = vmatpush.msra.mxu0 %v400
        %431 = vmatpush.msra.mxu0 %v398
        %432 = vmatpush.msra.mxu0 %v396
        %433 = vmatpush.msra.mxu0 %v394
        %434 = vmatpush.msra.mxu0 %v392
        %435 = vmatpush.msra.mxu0 %v390
        %436 = vmatpush.msra.mxu0 %v388
        %437 = vmatpush.msra.mxu0 %v386
        %438 = vmatpush.msra.mxu0 %v384
        %439 = vmatpush.msra.mxu0 %v382
        %440 = vmatpush.msra.mxu0 %v380
        %441 = vmatpush.msra.mxu0 %v378
        %442 = vmatpush.msra.mxu0 %v376
        %443 = vmatmul.f32.gmra.mxu0 %v299
        %v444 = vpop.f32.mrf.mxu0
        %v445 = vadd.f32 0.0, %v444
        %446 = vdwg.mxu0
        %v447 = vadd.f32 %v333, %v425
        %v448 = vadd.f32 %v353, %v445
        %v449 = vxor.u32 %v447, 2147483648
        %v450 = vxor.u32 %v448, 2147483648
        %v451 = vmul.f32 %v449, 1.442695
        %v452 = vpow.pop %v451
        %v453 = vmul.f32 %v450, 1.442695
        %v454 = vpow.pop %v453
        %v455 = vadd.f32 %v452, 1.0
        %v456 = vadd.f32 %v454, 1.0
        %v457 = vrcp.pop %v455
        %v458 = vmul.f32 %v455, %v457
        %v459 = vsub.f32 1.0, %v458
        %v460 = vmul.f32 %v457, %v459
        %v461 = vadd.f32 %v457, %v460
        %vm462 = vweird.f32 %v455
        %vm463 = vweird.f32 %v457
        %vm464 = vmor %vm462, %vm463
        %v465 = vsel %vm464, %v457, %v461
        %v466 = vand.u32 2147483647, %v455
        %vm467 = vcmp.eq.f32.partialorder %v466, 8.507059e+37
        %v468 = vand.u32 %v455, 2147483648
        %v469 = vor.u32 1.1754944e-38, %v468
        %v470 = vsel %vm467, %v469, %v465
        %v471 = vmul.f32 1.0, %v470
        %v472 = vrcp.pop %v456
        %v473 = vmul.f32 %v456, %v472
        %v474 = vsub.f32 1.0, %v473
        %v475 = vmul.f32 %v472, %v474
        %v476 = vadd.f32 %v472, %v475
        %vm477 = vweird.f32 %v456
        %vm478 = vweird.f32 %v472
        %vm479 = vmor %vm477, %vm478
        %v480 = vsel %vm479, %v472, %v476
        %v481 = vand.u32 2147483647, %v456
        %vm482 = vcmp.eq.f32.partialorder %v481, 8.507059e+37
        %v483 = vand.u32 %v456, 2147483648
        %v484 = vor.u32 1.1754944e-38, %v483
        %v485 = vsel %vm482, %v484, %v480
        %v486 = vmul.f32 1.0, %v485
        %v487 = vmul.f32 %v486, %v299
        %v488 = vld [vmem:[#allocation5] sm:$0xff]
        %v489 = vld [vmem:[#allocation5 + $0x8] sm:$0xff]
        %v490 = vld [vmem:[#allocation5 + $0x10] sm:$0xff]
        %v491 = vld [vmem:[#allocation5 + $0x18] sm:$0xff]
        %v492 = vld [vmem:[#allocation5 + $0x20] sm:$0xff]
        %v493 = vld [vmem:[#allocation5 + $0x28] sm:$0xff]
        %v494 = vld [vmem:[#allocation5 + $0x30] sm:$0xff]
        %v495 = vld [vmem:[#allocation5 + $0x38] sm:$0xff]
        %v496 = vld [vmem:[#allocation5 + $0x40] sm:$0xff]
        %v497 = vld [vmem:[#allocation5 + $0x48] sm:$0xff]
        %v498 = vld [vmem:[#allocation5 + $0x50] sm:$0xff]
        %v499 = vld [vmem:[#allocation5 + $0x58] sm:$0xff]
        %v500 = vld [vmem:[#allocation5 + $0x60] sm:$0xff]
        %v501 = vld [vmem:[#allocation5 + $0x68] sm:$0xff]
        %v502 = vld [vmem:[#allocation5 + $0x70] sm:$0xff]
        %v503 = vld [vmem:[#allocation5 + $0x78] sm:$0xff]
        %504 = vmatpush.msra.mxu0 %v503
        %505 = vmatpush.msra.mxu0 %v502
        %506 = vmatpush.msra.mxu0 %v501
        %507 = vmatpush.msra.mxu0 %v500
        %508 = vmatpush.msra.mxu0 %v499
        %509 = vmatpush.msra.mxu0 %v498
        %510 = vmatpush.msra.mxu0 %v497
        %511 = vmatpush.msra.mxu0 %v496
        %512 = vmatpush.msra.mxu0 %v495
        %513 = vmatpush.msra.mxu0 %v494
        %514 = vmatpush.msra.mxu0 %v493
        %515 = vmatpush.msra.mxu0 %v492
        %516 = vmatpush.msra.mxu0 %v491
        %517 = vmatpush.msra.mxu0 %v490
        %518 = vmatpush.msra.mxu0 %v489
        %519 = vmatpush.msra.mxu0 %v488
        %520 = vmatmul.f32.gmra.mxu0 %v487
        %v521 = vpop.f32.mrf.mxu0
        %v522 = vadd.f32 0.0, %v521
        %523 = vdwg.mxu0
        %v524 = vadd.f32 %v373, %v522
        %v525 = vtanh.pop %v524
        %v526 = vmul.f32 %v471, %v299
        %v527 = vsub.f32 1.0, %v471
        %v528 = vmul.f32 %v527, %v525
        %v529 = vadd.f32 %v526, %v528
        %530 = vst [vmem:[%s289] sm:$0xff] %v529
        %s531 = sand.u32 %s166, 1
        %s532 = scalar_lea.sflag [#allocation4], %s531
        %s533 = sand.u32 %s166, 1
        %s534 = smul.addr %s533, 8
        %s535 = scalar_lea.vmem [#allocation7], %s534
        // Predicated region
        $region53: #{_tgcn_cell_impl.1} parent=43 // pred_check
          %p536 = pneg %p176
        $region54: #{_tgcn_cell_impl.1} parent=43 // pred_check_branch
          %538 = sbr.rel (%p536) target = $region56
        $region55: #{_tgcn_cell_impl.1} parent=43 // pred_region
          %540 = vsyncadd %s532, 0
          %s541 = smul.addr %s22, 8
          %s542 = scalar_lea.hbm %s6, %s541
          %s544 = sshll.u32 %s535, 4
          %s545 = int_to_ptr.vmem [resolvable:$true] %s544
          %s546 = sshll.u32 %s542, 4
          %s547 = int_to_ptr.hbm [resolvable:$true] %s546
          %549 = dma.vmem_to_hbm [thread:$0]  %s545, 128, %s547, %s532
        $region56: #{_tgcn_cell_impl.1} parent=43 // pred_fallthru
          _
      $region44: #{_tgcn_cell_impl.1} parent=5 // pred_fallthru
        _
      %p550 = scmp.le.s32.totalorder 2, %s17
      // Predicated region
      $region57: #{_tgcn_cell_impl.1} parent=5 // pred_check
        %p551 = pneg %p550
      $region58: #{_tgcn_cell_impl.1} parent=5 // pred_check_branch
        %553 = sbr.rel (%p551) target = $region60
      $region59: #{_tgcn_cell_impl.1} parent=5 // pred_region
        %s554 = ssub.s32 %s17, 2
        // Predicated region
        $region61: #{_tgcn_cell_impl.1} parent=59 // pred_check
          %p555 = pneg %p182
        $region62: #{_tgcn_cell_impl.1} parent=59 // pred_check_branch
          %557 = sbr.rel (%p555) target = $region64
        $region63: #{_tgcn_cell_impl.1} parent=59 // pred_region
          %s558 = sand.u32 %s167, 1
          %s559 = scalar_lea.sflag [#allocation4], %s558
          %s560 = sand.u32 %s167, 1
          %s561 = smul.addr %s560, 8
          %s562 = scalar_lea.vmem [#allocation7], %s561
          %564 = dma.done %s559, 128
        $region64: #{_tgcn_cell_impl.1} parent=59 // pred_fallthru
          _
      $region60: #{_tgcn_cell_impl.1} parent=5 // pred_fallthru
        _
    $region6: #{_tgcn_cell_impl.1} parent=1 // loop_footer
      %s21 = sadd.s32 1, %s17
    $region7: #{_tgcn_cell_impl.1} parent=1 // loop_footer_branch
      %16 = sbr.rel target = $region3
    $region8: #{_tgcn_cell_impl.1} parent=1 // loop_exit
      _
    %565 = vsyncpa [#allocation3], 1
    %s566 = scalar_lea.sflag [#allocation3], 1
    %567 = vsyncpa %s566, 1
    %568 = vsyncpa [#allocation6], 1
    %569 = vsyncpa [#allocation4], 1
    %s570 = scalar_lea.sflag [#allocation4], 1
    %571 = vsyncpa %s570, 1

// kernel: _tgcn_cell_impl.1
$region0: #{_tgcn_cell_impl.1}
  #allocation0 [shape = 'u32[]', space=smem, size = 0x4, offset = 0x4, fixed_abs, tag = 'smem constant byte address 0x4 - core index']
  #allocation1 [shape = 'u32[72,128]{1,0:T(1,128)}', space=vmem, size = 0x9000, scoped, tag = 'internal scratch']
  %s0 = inlined_call_operand.vmem [shape: f32[32,8], index: 0, kind: input, shape index: {}]
  %s1 = inlined_call_operand.vmem [shape: f32[32,128], index: 1, kind: input, shape index: {}]
  %s2 = inlined_call_operand.vmem [shape: f32[8,384], index: 2, kind: input, shape index: {}]
  %s3 = inlined_call_operand.hbm [shape: f32[128,256], index: 3, kind: input, shape index: {}]
  %s4 = inlined_call_operand.hbm [shape: f32[128,128], index: 4, kind: input, shape index: {}]
  %s5 = inlined_call_operand.vmem [shape: f32[1,384], index: 5, kind: input, shape index: {}]
  %s6 = inlined_call_operand.hbm [shape: f32[32,128], index: 6, kind: output, shape index: {}]
  %s7 = sld [smem:[#allocation0]]
  $region65: #{_tgcn_cell_impl.1} parent=0
    _
  %s9 = ssub.s32 1, %s7
  %s10 = scalar_select 0, %s9, %s7
  $region1: #{_tgcn_cell_impl.1} parent=0
    #allocation2 [shape = 'u8[131072]{0}', space=vmem, size = 0x20000, scoped, tag = 'input window, operand 3, single buffered']
    #allocation3 [shape = 's32[2]{0}', space=sflag, size = 0x8, scoped, tag = 'scoped memory for _tgcn_cell_impl.1']
    #allocation4 [shape = 's32[2]{0}', space=sflag, size = 0x8, scoped, tag = 'scoped memory for _tgcn_cell_impl.1']
    #allocation5 [shape = 'u8[65536]{0}', space=vmem, size = 0x10000, scoped, tag = 'input window, operand 4, single buffered']
    #allocation6 [shape = 's32[1]{0}', space=sflag, size = 0x4, scoped, tag = 'scoped memory for _tgcn_cell_impl.1']
    #allocation7 [shape = 'u8[8192]{0}', space=vmem, size = 0x2000, scoped, tag = 'output window, operand 0']
    %11 = vsyncpa [#allocation3], 0
    %12 = vsyncpa [#allocation6], 0
    %13 = vsyncpa [#allocation4], 0
    %s14 = scalar_lea.sflag [#allocation4], 1
    %15 = vsyncpa %s14, 0
    loop: start=0, step=1, limit=6
    $region2: #{_tgcn_cell_impl.1} parent=1 // loop_pre_header
      _
    $region3: #{_tgcn_cell_impl.1} parent=1 // loop_header
      %s17 = sphi 0, %s21
      %p18 = scmp.ge.s32.totalorder %s17, 6
      %s27 = sphi 0, %s29
      %s30 = sphi 0, %s27
      %s31 = sphi 0, %s30
      %s47 = sphi 0, %s31
      %s53 = sphi 0, %s55
      %s56 = sphi 0, %s53
      %s57 = sphi 0, %s56
      %s73 = sphi 0, %s57
      %s77 = sphi 0, %s77
      %s79 = sphi 0, %s77
      %s80 = sphi 0, %s79
      %s94 = sphi 0, %s80
      %s98 = sphi 0, %s98
      %s100 = sphi 0, %s98
      %s101 = sphi 0, %s100
      %s115 = sphi 0, %s101
      %s119 = sphi 0, %s119
      %s121 = sphi 0, %s119
      %s122 = sphi 0, %s121
      %s136 = sphi 0, %s122
      %s140 = sphi 0, %s140
      %s142 = sphi 0, %s140
      %s143 = sphi 0, %s142
      %s157 = sphi 0, %s143
      %s163 = sphi 0, %s165
      %s166 = sphi 0, %s163
      %s167 = sphi 0, %s166
      %s183 = sphi 0, %s167
    $region4: #{_tgcn_cell_impl.1} parent=1 // loop_header_branch
      %20 = sbr.rel (%p18) target = $region8
    $region5: #{_tgcn_cell_impl.1} parent=1 // loop_body
      %s22 = ssub.s32 %s17, 1
      %s23 = ssub.s32 %s17, 2
      %s24 = sadd.s32 %s17, 1
      %s25 = ssub.s32 %s17, %s24
      %p26 = scmp.eq.s32.totalorder %s25, 0
      %s28 = sadd.s32 %s27, 1
      %s29 = scalar_select %p26, %s27, %s28
      %p32 = pneg %p26
      %p33 = scmp.eq.s32.totalorder %s17, 3
      %p34 = por %p32, %p33
      %p35 = scmp.ne.s32.totalorder %s27, %s30
      %p36 = scmp.eq.s32.totalorder %s17, 0
      %p37 = por %p35, %p36
      %p38 = scmp.ne.s32.totalorder %s27, %s30
      %p39 = scmp.eq.s32.totalorder %s22, 3
      %p40 = por %p38, %p39
      %p41 = scmp.ne.s32.totalorder %s30, %s31
      %p42 = scmp.eq.s32.totalorder %s22, 0
      %p43 = por %p41, %p42
      %p44 = scmp.ne.s32.totalorder %s30, %s31
      %p45 = scmp.eq.s32.totalorder %s23, 3
      %p46 = por %p44, %p45
      %p48 = scmp.ne.s32.totalorder %s31, %s47
      %p49 = scmp.eq.s32.totalorder %s23, 0
      %p50 = por %p48, %p49
      %s51 = ssub.s32 %s17, %s24
      %p52 = scmp.eq.s32.totalorder %s51, 0
      %s54 = sadd.s32 %s53, 1
      %s55 = scalar_select %p52, %s53, %s54
      %p58 = pneg %p52
      %p59 = scmp.eq.s32.totalorder %s17, 3
      %p60 = por %p58, %p59
      %p61 = scmp.ne.s32.totalorder %s53, %s56
      %p62 = scmp.eq.s32.totalorder %s17, 0
      %p63 = por %p61, %p62
      %p64 = scmp.ne.s32.totalorder %s53, %s56
      %p65 = scmp.eq.s32.totalorder %s22, 3
      %p66 = por %p64, %p65
      %p67 = scmp.ne.s32.totalorder %s56, %s57
      %p68 = scmp.eq.s32.totalorder %s22, 0
      %p69 = por %p67, %p68
      %p70 = scmp.ne.s32.totalorder %s56, %s57
      %p71 = scmp.eq.s32.totalorder %s23, 3
      %p72 = por %p70, %p71
      %p74 = scmp.ne.s32.totalorder %s57, %s73
      %p75 = scmp.eq.s32.totalorder %s23, 0
      %p76 = por %p74, %p75
      %s78 = sadd.s32 %s77, 1
      %p81 = scmp.eq.s32.totalorder %s17, 3
      %p82 = scmp.ne.s32.totalorder %s77, %s79
      %p83 = scmp.eq.s32.totalorder %s17, 0
      %p84 = por %p82, %p83
      %p85 = scmp.ne.s32.totalorder %s77, %s79
      %p86 = scmp.eq.s32.totalorder %s22, 3
      %p87 = por %p85, %p86
      %p88 = scmp.ne.s32.totalorder %s79, %s80
      %p89 = scmp.eq.s32.totalorder %s22, 0
      %p90 = por %p88, %p89
      %p91 = scmp.ne.s32.totalorder %s79, %s80
      %p92 = scmp.eq.s32.totalorder %s23, 3
      %p93 = por %p91, %p92
      %p95 = scmp.ne.s32.totalorder %s80, %s94
      %p96 = scmp.eq.s32.totalorder %s23, 0
      %p97 = por %p95, %p96
      %s99 = sadd.s32 %s98, 1
      %p102 = scmp.eq.s32.totalorder %s17, 3
      %p103 = scmp.ne.s32.totalorder %s98, %s100
      %p104 = scmp.eq.s32.totalorder %s17, 0
      %p105 = por %p103, %p104
      %p106 = scmp.ne.s32.totalorder %s98, %s100
      %p107 = scmp.eq.s32.totalorder %s22, 3
      %p108 = por %p106, %p107
      %p109 = scmp.ne.s32.totalorder %s100, %s101
      %p110 = scmp.eq.s32.totalorder %s22, 0
      %p111 = por %p109, %p110
      %p112 = scmp.ne.s32.totalorder %s100, %s101
      %p113 = scmp.eq.s32.totalorder %s23, 3
      %p114 = por %p112, %p113
      %p116 = scmp.ne.s32.totalorder %s101, %s115
      %p117 = scmp.eq.s32.totalorder %s23, 0
      %p118 = por %p116, %p117
      %s120 = sadd.s32 %s119, 1
      %p123 = scmp.eq.s32.totalorder %s17, 3
      %p124 = scmp.ne.s32.totalorder %s119, %s121
      %p125 = scmp.eq.s32.totalorder %s17, 0
      %p126 = por %p124, %p125
      %p127 = scmp.ne.s32.totalorder %s119, %s121
      %p128 = scmp.eq.s32.totalorder %s22, 3
      %p129 = por %p127, %p128
      %p130 = scmp.ne.s32.totalorder %s121, %s122
      %p131 = scmp.eq.s32.totalorder %s22, 0
      %p132 = por %p130, %p131
      %p133 = scmp.ne.s32.totalorder %s121, %s122
      %p134 = scmp.eq.s32.totalorder %s23, 3
      %p135 = por %p133, %p134
      %p137 = scmp.ne.s32.totalorder %s122, %s136
      %p138 = scmp.eq.s32.totalorder %s23, 0
      %p139 = por %p137, %p138
      %s141 = sadd.s32 %s140, 1
      %p144 = scmp.eq.s32.totalorder %s17, 3
      %p145 = scmp.ne.s32.totalorder %s140, %s142
      %p146 = scmp.eq.s32.totalorder %s17, 0
      %p147 = por %p145, %p146
      %p148 = scmp.ne.s32.totalorder %s140, %s142
      %p149 = scmp.eq.s32.totalorder %s22, 3
      %p150 = por %p148, %p149
      %p151 = scmp.ne.s32.totalorder %s142, %s143
      %p152 = scmp.eq.s32.totalorder %s22, 0
      %p153 = por %p151, %p152
      %p154 = scmp.ne.s32.totalorder %s142, %s143
      %p155 = scmp.eq.s32.totalorder %s23, 3
      %p156 = por %p154, %p155
      %p158 = scmp.ne.s32.totalorder %s143, %s157
      %p159 = scmp.eq.s32.totalorder %s23, 0
      %p160 = por %p158, %p159
      %s161 = ssub.s32 %s17, %s24
      %p162 = scmp.eq.s32.totalorder %s161, 0
      %s164 = sadd.s32 %s163, 1
      %s165 = scalar_select %p162, %s163, %s164
      %p168 = pneg %p162
      %p169 = scmp.eq.s32.totalorder %s17, 3
      %p170 = por %p168, %p169
      %p171 = scmp.ne.s32.totalorder %s163, %s166
      %p172 = scmp.eq.s32.totalorder %s17, 0
      %p173 = por %p171, %p172
      %p174 = scmp.ne.s32.totalorder %s163, %s166
      %p175 = scmp.eq.s32.totalorder %s22, 3
      %p176 = por %p174, %p175
      %p177 = scmp.ne.s32.totalorder %s166, %s167
      %p178 = scmp.eq.s32.totalorder %s22, 0
      %p179 = por %p177, %p178
      %p180 = scmp.ne.s32.totalorder %s166, %s167
      %p181 = scmp.eq.s32.totalorder %s23, 3
      %p182 = por %p180, %p181
      %p184 = scmp.ne.s32.totalorder %s167, %s183
      %p185 = scmp.eq.s32.totalorder %s23, 0
      %p186 = por %p184, %p185
      %p187 = scmp.le.s32.totalorder 1, %s17
      %p188 = scmp.lt.s32.totalorder %s17, 5
      %p189 = pnand %p187, %p188
      %p190 = pneg %p189
      // Predicated region
      $region9: #{_tgcn_cell_impl.1} parent=5 // pred_check
        _
      $region10: #{_tgcn_cell_impl.1} parent=5 // pred_check_branch
        %192 = sbr.rel (%p189) target = $region12
      $region11: #{_tgcn_cell_impl.1} parent=5 // pred_region
        %s193 = ssub.s32 %s17, 1
        // Predicated region
        $region13: #{_tgcn_cell_impl.1} parent=11 // pred_check
          %p194 = pneg %p90
        $region14: #{_tgcn_cell_impl.1} parent=11 // pred_check_branch
          %196 = sbr.rel (%p194) target = $region16
        $region15: #{_tgcn_cell_impl.1} parent=11 // pred_region
          _
        $region16: #{_tgcn_cell_impl.1} parent=11 // pred_fallthru
          _
        // Predicated region
        $region17: #{_tgcn_cell_impl.1} parent=11 // pred_check
          %p197 = pneg %p111
        $region18: #{_tgcn_cell_impl.1} parent=11 // pred_check_branch
          %199 = sbr.rel (%p197) target = $region20
        $region19: #{_tgcn_cell_impl.1} parent=11 // pred_region
          %201 = vsyncadd [#allocation3], 0
          %s202 = sshll.u32 %s3, 4
          %s203 = int_to_ptr.hbm [resolvable:$true] %s202
          %s204 = sshll.u32 [#allocation2], 4
          %s205 = int_to_ptr.vmem [resolvable:$true] %s204
          %210 = dma.hbm_to_vmem [thread:$0]  %s203, 4096, %s205, [#allocation3], 256, 256, 16
        $region20: #{_tgcn_cell_impl.1} parent=11 // pred_fallthru
          _
        // Predicated region
        $region21: #{_tgcn_cell_impl.1} parent=11 // pred_check
          %p211 = pneg %p132
        $region22: #{_tgcn_cell_impl.1} parent=11 // pred_check_branch
          %213 = sbr.rel (%p211) target = $region24
        $region23: #{_tgcn_cell_impl.1} parent=11 // pred_region
          %215 = vsyncadd [#allocation6], 0
          %s216 = sshll.u32 %s4, 4
          %s217 = int_to_ptr.hbm [resolvable:$true] %s216
          %s218 = sshll.u32 [#allocation5], 4
          %s219 = int_to_ptr.vmem [resolvable:$true] %s218
          %224 = dma.hbm_to_vmem [thread:$0]  %s217, 2048, %s219, [#allocation6], 128, 128, 8
        $region24: #{_tgcn_cell_impl.1} parent=11 // pred_fallthru
          _
        // Predicated region
        $region25: #{_tgcn_cell_impl.1} parent=11 // pred_check
          %p225 = pneg %p153
        $region26: #{_tgcn_cell_impl.1} parent=11 // pred_check_branch
          %227 = sbr.rel (%p225) target = $region28
        $region27: #{_tgcn_cell_impl.1} parent=11 // pred_region
          _
        $region28: #{_tgcn_cell_impl.1} parent=11 // pred_fallthru
          _
      $region12: #{_tgcn_cell_impl.1} parent=5 // pred_fallthru
        _
      %p228 = scmp.lt.s32.totalorder %s17, 4
      // Predicated region
      $region29: #{_tgcn_cell_impl.1} parent=5 // pred_check
        %p229 = pneg %p228
      $region30: #{_tgcn_cell_impl.1} parent=5 // pred_check_branch
        %231 = sbr.rel (%p229) target = $region32
      $region31: #{_tgcn_cell_impl.1} parent=5 // pred_region
        // Predicated region
        $region33: #{_tgcn_cell_impl.1} parent=31 // pred_check
          %p232 = pneg %p37
        $region34: #{_tgcn_cell_impl.1} parent=31 // pred_check_branch
          %234 = sbr.rel (%p232) target = $region36
        $region35: #{_tgcn_cell_impl.1} parent=31 // pred_region
          %p235 = scmp.lt.s32.totalorder %s17, 3
          %s236 = scalar_select %p235, %s17, 3
          %s237 = smul.addr %s236, 8
          %s238 = scalar_lea.vmem %s0, %s237
        $region36: #{_tgcn_cell_impl.1} parent=31 // pred_fallthru
          _
        // Predicated region
        $region37: #{_tgcn_cell_impl.1} parent=31 // pred_check
          %p239 = pneg %p63
        $region38: #{_tgcn_cell_impl.1} parent=31 // pred_check_branch
          %241 = sbr.rel (%p239) target = $region40
        $region39: #{_tgcn_cell_impl.1} parent=31 // pred_region
          %p242 = scmp.lt.s32.totalorder %s17, 3
          %s243 = scalar_select %p242, %s17, 3
          %s244 = smul.addr %s243, 8
          %s245 = scalar_lea.vmem %s1, %s244
        $region40: #{_tgcn_cell_impl.1} parent=31 // pred_fallthru
          _
      $region32: #{_tgcn_cell_impl.1} parent=5 // pred_fallthru
        _
      %p246 = scmp.le.s32.totalorder 1, %s17
      %p247 = scmp.lt.s32.totalorder %s17, 5
      %p248 = pnand %p246, %p247
      %p249 = pneg %p248
      // Predicated region
      $region41: #{_tgcn_cell_impl.1} parent=5 // pred_check
        _
      $region42: #{_tgcn_cell_impl.1} parent=5 // pred_check_branch
        %251 = sbr.rel (%p248) target = $region44
      $region43: #{_tgcn_cell_impl.1} parent=5 // pred_region
        %s252 = ssub.s32 %s17, 1
        // Predicated region
        $region45: #{_tgcn_cell_impl.1} parent=43 // pred_check
          %p253 = pneg %p111
        $region46: #{_tgcn_cell_impl.1} parent=43 // pred_check_branch
          %255 = sbr.rel (%p253) target = $region48
        $region47: #{_tgcn_cell_impl.1} parent=43 // pred_region
          %257 = dma.done [#allocation3], 4096
        $region48: #{_tgcn_cell_impl.1} parent=43 // pred_fallthru
          _
        // Predicated region
        $region49: #{_tgcn_cell_impl.1} parent=43 // pred_check
          %p258 = pneg %p132
        $region50: #{_tgcn_cell_impl.1} parent=43 // pred_check_branch
          %260 = sbr.rel (%p258) target = $region52
        $region51: #{_tgcn_cell_impl.1} parent=43 // pred_region
          %262 = dma.done [#allocation6], 2048
        $region52: #{_tgcn_cell_impl.1} parent=43 // pred_fallthru
          _
        %p263 = scmp.lt.s32.totalorder %s22, 3
        %s264 = scalar_select %p263, %s22, 3
        %s265 = smul.addr %s264, 8
        %s266 = scalar_lea.vmem %s0, %s265
        %p267 = pneg %p43
        %p268 = pneg %p40
        %p269 = scmp.lt.s32.totalorder %s22, 3
        %s270 = scalar_select %p269, %s22, 3
        %s271 = smul.addr %s270, 8
        %s272 = scalar_lea.vmem %s1, %s271
        %p273 = pneg %p69
        %p274 = pneg %p66
        %p275 = pneg %p90
        %p276 = pneg %p87
        %p277 = pneg %p111
        %p278 = pneg %p108
        %p279 = pneg %p132
        %p280 = pneg %p129
        %p281 = pneg %p153
        %p282 = pneg %p150
        %p283 = pneg %p179
        %p284 = pneg %p176
        %s285 = sand.u32 %s166, 1
        %s286 = scalar_lea.sflag [#allocation4], %s285
        %s287 = sand.u32 %s166, 1
        %s288 = smul.addr %s287, 8
        %s289 = scalar_lea.vmem [#allocation7], %s288
        %p290 = scmp.lt.s32.totalorder %s22, 3
        %s291 = scalar_select %p290, %s22, 3
        %s292 = smul.addr %s291, 8
        %s293 = scalar_lea.vmem %s0, %s292
        %p294 = scmp.lt.s32.totalorder %s22, 3
        %s295 = scalar_select %p294, %s22, 3
        %s296 = smul.addr %s295, 8
        %s297 = scalar_lea.vmem %s1, %s296
        %v298 = vld [vmem:[%s293] sm:$0xff]
        %v299 = vld [vmem:[%s297] sm:$0xff]
        %v300 = vld [vmem:[%s2] sm:$0xff]
        %v301 = vld [vmem:[%s2 + $0x8] sm:$0xff]
        %v302 = vld [vmem:[%s2 + $0x10] sm:$0xff]
        %v303 = vld [vmem:[%s5] sm:$0x7]
        %v305 = vperm.slane %v303, 0
        %v306 = vperm.slane %v303, 1
        %v307 = vperm.slane %v303, 2
        %vm311 = vcmask 64512
        %v313 = vsel %vm311, %v298, 0
        %315 = vmatpush.msra.mxu0 0.0
        %316 = vmatpush.msra.mxu0 0.0
        %317 = vmatpush.msra.mxu0 0.0
        %318 = vmatpush.msra.mxu0 0.0
        %319 = vmatpush.msra.mxu0 0.0
        %320 = vmatpush.msra.mxu0 0.0
        %321 = vmatpush.msra.mxu0 0.0
        %322 = vmatpush.msra.mxu0 0.0
        %323 = vmatpush.msra.mxu0 0.0
        %324 = vmatpush.msra.mxu0 0.0
        %325 = vmatpush.msra.mxu0 0.0
        %326 = vmatpush.msra.mxu0 0.0
        %327 = vmatpush.msra.mxu0 0.0
        %328 = vmatpush.msra.mxu0 0.0
        %329 = vmatpush.msra.mxu0 0.0
        %330 = vmatpush.msra.mxu0 %v300
        %331 = vmatmul.f32.gmra.mxu0 %v313
        %v332 = vpop.f32.mrf.mxu0
        %v333 = vadd.f32 %v305, %v332
        %334 = vdwg.mxu0
        %335 = vmatpush.msra.mxu0 0.0
        %336 = vmatpush.msra.mxu0 0.0
        %337 = vmatpush.msra.mxu0 0.0
        %338 = vmatpush.msra.mxu0 0.0
        %339 = vmatpush.msra.mxu0 0.0
        %340 = vmatpush.msra.mxu0 0.0
        %341 = vmatpush.msra.mxu0 0.0
        %342 = vmatpush.msra.mxu0 0.0
        %343 = vmatpush.msra.mxu0 0.0
        %344 = vmatpush.msra.mxu0 0.0
        %345 = vmatpush.msra.mxu0 0.0
        %346 = vmatpush.msra.mxu0 0.0
        %347 = vmatpush.msra.mxu0 0.0
        %348 = vmatpush.msra.mxu0 0.0
        %349 = vmatpush.msra.mxu0 0.0
        %350 = vmatpush.msra.mxu0 %v301
        %351 = vmatmul.f32.gmra.mxu0 %v313
        %v352 = vpop.f32.mrf.mxu0
        %v353 = vadd.f32 %v306, %v352
        %354 = vdwg.mxu0
        %355 = vmatpush.msra.mxu0 0.0
        %356 = vmatpush.msra.mxu0 0.0
        %357 = vmatpush.msra.mxu0 0.0
        %358 = vmatpush.msra.mxu0 0.0
        %359 = vmatpush.msra.mxu0 0.0
        %360 = vmatpush.msra.mxu0 0.0
        %361 = vmatpush.msra.mxu0 0.0
        %362 = vmatpush.msra.mxu0 0.0
        %363 = vmatpush.msra.mxu0 0.0
        %364 = vmatpush.msra.mxu0 0.0
        %365 = vmatpush.msra.mxu0 0.0
        %366 = vmatpush.msra.mxu0 0.0
        %367 = vmatpush.msra.mxu0 0.0
        %368 = vmatpush.msra.mxu0 0.0
        %369 = vmatpush.msra.mxu0 0.0
        %370 = vmatpush.msra.mxu0 %v302
        %371 = vmatmul.f32.gmra.mxu0 %v313
        %v372 = vpop.f32.mrf.mxu0
        %v373 = vadd.f32 %v307, %v372
        %374 = vdwg.mxu0
        %v375 = vld [vmem:[#allocation2] sm:$0xff]
        %v376 = vld [vmem:[#allocation2 + $0x8] sm:$0xff]
        %v377 = vld [vmem:[#allocation2 + $0x10] sm:$0xff]
        %v378 = vld [vmem:[#allocation2 + $0x18] sm:$0xff]
        %v379 = vld [vmem:[#allocation2 + $0x20] sm:$0xff]
        %v380 = vld [vmem:[#allocation2 + $0x28] sm:$0xff]
        %v381 = vld [vmem:[#allocation2 + $0x30] sm:$0xff]
        %v382 = vld [vmem:[#allocation2 + $0x38] sm:$0xff]
        %v383 = vld [vmem:[#allocation2 + $0x40] sm:$0xff]
        %v384 = vld [vmem:[#allocation2 + $0x48] sm:$0xff]
        %v385 = vld [vmem:[#allocation2 + $0x50] sm:$0xff]
        %v386 = vld [vmem:[#allocation2 + $0x58] sm:$0xff]
        %v387 = vld [vmem:[#allocation2 + $0x60] sm:$0xff]
        %v388 = vld [vmem:[#allocation2 + $0x68] sm:$0xff]
        %v389 = vld [vmem:[#allocation2 + $0x70] sm:$0xff]
        %v390 = vld [vmem:[#allocation2 + $0x78] sm:$0xff]
        %v391 = vld [vmem:[#allocation2 + $0x80] sm:$0xff]
        %v392 = vld [vmem:[#allocation2 + $0x88] sm:$0xff]
        %v393 = vld [vmem:[#allocation2 + $0x90] sm:$0xff]
        %v394 = vld [vmem:[#allocation2 + $0x98] sm:$0xff]
        %v395 = vld [vmem:[#allocation2 + $0xa0] sm:$0xff]
        %v396 = vld [vmem:[#allocation2 + $0xa8] sm:$0xff]
        %v397 = vld [vmem:[#allocation2 + $0xb0] sm:$0xff]
        %v398 = vld [vmem:[#allocation2 + $0xb8] sm:$0xff]
        %v399 = vld [vmem:[#allocation2 + $0xc0] sm:$0xff]
        %v400 = vld [vmem:[#allocation2 + $0xc8] sm:$0xff]
        %v401 = vld [vmem:[#allocation2 + $0xd0] sm:$0xff]
        %v402 = vld [vmem:[#allocation2 + $0xd8] sm:$0xff]
        %v403 = vld [vmem:[#allocation2 + $0xe0] sm:$0xff]
        %v404 = vld [vmem:[#allocation2 + $0xe8] sm:$0xff]
        %v405 = vld [vmem:[#allocation2 + $0xf0] sm:$0xff]
        %v406 = vld [vmem:[#allocation2 + $0xf8] sm:$0xff]
        %407 = vmatpush.msra.mxu0 %v405
        %408 = vmatpush.msra.mxu0 %v403
        %409 = vmatpush.msra.mxu0 %v401
        %410 = vmatpush.msra.mxu0 %v399
        %411 = vmatpush.msra.mxu0 %v397
        %412 = vmatpush.msra.mxu0 %v395
        %413 = vmatpush.msra.mxu0 %v393
        %414 = vmatpush.msra.mxu0 %v391
        %415 = vmatpush.msra.mxu0 %v389
        %416 = vmatpush.msra.mxu0 %v387
        %417 = vmatpush.msra.mxu0 %v385
        %418 = vmatpush.msra.mxu0 %v383
        %419 = vmatpush.msra.mxu0 %v381
        %420 = vmatpush.msra.mxu0 %v379
        %421 = vmatpush.msra.mxu0 %v377
        %422 = vmatpush.msra.mxu0 %v375
        %423 = vmatmul.f32.gmra.mxu0 %v299
        %v424 = vpop.f32.mrf.mxu0
        %v425 = vadd.f32 0.0, %v424
        %426 = vdwg.mxu0
        %427 = vmatpush.msra.mxu0 %v406
        %428 = vmatpush.msra.mxu0 %v404
        %429 = vmatpush.msra.mxu0 %v402
        %430 = vmatpush.msra.mxu0 %v400
        %431 = vmatpush.msra.mxu0 %v398
        %432 = vmatpush.msra.mxu0 %v396
        %433 = vmatpush.msra.mxu0 %v394
        %434 = vmatpush.msra.mxu0 %v392
        %435 = vmatpush.msra.mxu0 %v390
        %436 = vmatpush.msra.mxu0 %v388
        %437 = vmatpush.msra.mxu0 %v386
        %438 = vmatpush.msra.mxu0 %v384
        %439 = vmatpush.msra.mxu0 %v382
        %440 = vmatpush.msra.mxu0 %v380
        %441 = vmatpush.msra.mxu0 %v378
        %442 = vmatpush.msra.mxu0 %v376
        %443 = vmatmul.f32.gmra.mxu0 %v299
        %v444 = vpop.f32.mrf.mxu0
        %v445 = vadd.f32 0.0, %v444
        %446 = vdwg.mxu0
        %v447 = vadd.f32 %v333, %v425
        %v448 = vadd.f32 %v353, %v445
        %v449 = vxor.u32 %v447, 2147483648
        %v450 = vxor.u32 %v448, 2147483648
        %v451 = vmul.f32 %v449, 1.442695
        %v452 = vpow.pop %v451
        %v453 = vmul.f32 %v450, 1.442695
        %v454 = vpow.pop %v453
        %v455 = vadd.f32 %v452, 1.0
        %v456 = vadd.f32 %v454, 1.0
        %v457 = vrcp.pop %v455
        %v458 = vmul.f32 %v455, %v457
        %v459 = vsub.f32 1.0, %v458
        %v460 = vmul.f32 %v457, %v459
        %v461 = vadd.f32 %v457, %v460
        %vm462 = vweird.f32 %v455
        %vm463 = vweird.f32 %v457
        %vm464 = vmor %vm462, %vm463
        %v465 = vsel %vm464, %v457, %v461
        %v466 = vand.u32 2147483647, %v455
        %vm467 = vcmp.eq.f32.partialorder %v466, 8.507059e+37
        %v468 = vand.u32 %v455, 2147483648
        %v469 = vor.u32 1.1754944e-38, %v468
        %v470 = vsel %vm467, %v469, %v465
        %v471 = vmul.f32 1.0, %v470
        %v472 = vrcp.pop %v456
        %v473 = vmul.f32 %v456, %v472
        %v474 = vsub.f32 1.0, %v473
        %v475 = vmul.f32 %v472, %v474
        %v476 = vadd.f32 %v472, %v475
        %vm477 = vweird.f32 %v456
        %vm478 = vweird.f32 %v472
        %vm479 = vmor %vm477, %vm478
        %v480 = vsel %vm479, %v472, %v476
        %v481 = vand.u32 2147483647, %v456
        %vm482 = vcmp.eq.f32.partialorder %v481, 8.507059e+37
        %v483 = vand.u32 %v456, 2147483648
        %v484 = vor.u32 1.1754944e-38, %v483
        %v485 = vsel %vm482, %v484, %v480
        %v486 = vmul.f32 1.0, %v485
        %v487 = vmul.f32 %v486, %v299
        %v488 = vld [vmem:[#allocation5] sm:$0xff]
        %v489 = vld [vmem:[#allocation5 + $0x8] sm:$0xff]
        %v490 = vld [vmem:[#allocation5 + $0x10] sm:$0xff]
        %v491 = vld [vmem:[#allocation5 + $0x18] sm:$0xff]
        %v492 = vld [vmem:[#allocation5 + $0x20] sm:$0xff]
        %v493 = vld [vmem:[#allocation5 + $0x28] sm:$0xff]
        %v494 = vld [vmem:[#allocation5 + $0x30] sm:$0xff]
        %v495 = vld [vmem:[#allocation5 + $0x38] sm:$0xff]
        %v496 = vld [vmem:[#allocation5 + $0x40] sm:$0xff]
        %v497 = vld [vmem:[#allocation5 + $0x48] sm:$0xff]
        %v498 = vld [vmem:[#allocation5 + $0x50] sm:$0xff]
        %v499 = vld [vmem:[#allocation5 + $0x58] sm:$0xff]
        %v500 = vld [vmem:[#allocation5 + $0x60] sm:$0xff]
        %v501 = vld [vmem:[#allocation5 + $0x68] sm:$0xff]
        %v502 = vld [vmem:[#allocation5 + $0x70] sm:$0xff]
        %v503 = vld [vmem:[#allocation5 + $0x78] sm:$0xff]
        %504 = vmatpush.msra.mxu0 %v503
        %505 = vmatpush.msra.mxu0 %v502
        %506 = vmatpush.msra.mxu0 %v501
        %507 = vmatpush.msra.mxu0 %v500
        %508 = vmatpush.msra.mxu0 %v499
        %509 = vmatpush.msra.mxu0 %v498
        %510 = vmatpush.msra.mxu0 %v497
        %511 = vmatpush.msra.mxu0 %v496
        %512 = vmatpush.msra.mxu0 %v495
        %513 = vmatpush.msra.mxu0 %v494
        %514 = vmatpush.msra.mxu0 %v493
        %515 = vmatpush.msra.mxu0 %v492
        %516 = vmatpush.msra.mxu0 %v491
        %517 = vmatpush.msra.mxu0 %v490
        %518 = vmatpush.msra.mxu0 %v489
        %519 = vmatpush.msra.mxu0 %v488
        %520 = vmatmul.f32.gmra.mxu0 %v487
        %v521 = vpop.f32.mrf.mxu0
        %v522 = vadd.f32 0.0, %v521
        %523 = vdwg.mxu0
        %v524 = vadd.f32 %v373, %v522
        %v525 = vtanh.pop %v524
        %v526 = vmul.f32 %v471, %v299
        %v527 = vsub.f32 1.0, %v471
        %v528 = vmul.f32 %v527, %v525
        %v529 = vadd.f32 %v526, %v528
        %530 = vst [vmem:[%s289] sm:$0xff] %v529
        %s531 = sand.u32 %s166, 1
        %s532 = scalar_lea.sflag [#allocation4], %s531
        %s533 = sand.u32 %s166, 1
        %s534 = smul.addr %s533, 8
        %s535 = scalar_lea.vmem [#allocation7], %s534
        // Predicated region
        $region53: #{_tgcn_cell_impl.1} parent=43 // pred_check
          %p536 = pneg %p176
        $region54: #{_tgcn_cell_impl.1} parent=43 // pred_check_branch
          %538 = sbr.rel (%p536) target = $region56
        $region55: #{_tgcn_cell_impl.1} parent=43 // pred_region
          %540 = vsyncadd %s532, 0
          %s541 = smul.addr %s22, 8
          %s542 = scalar_lea.hbm %s6, %s541
          %s544 = sshll.u32 %s535, 4
          %s545 = int_to_ptr.vmem [resolvable:$true] %s544
          %s546 = sshll.u32 %s542, 4
          %s547 = int_to_ptr.hbm [resolvable:$true] %s546
          %549 = dma.vmem_to_hbm [thread:$0]  %s545, 128, %s547, %s532
        $region56: #{_tgcn_cell_impl.1} parent=43 // pred_fallthru
          _
      $region44: #{_tgcn_cell_impl.1} parent=5 // pred_fallthru
        _
      %p550 = scmp.le.s32.totalorder 2, %s17
      // Predicated region
      $region57: #{_tgcn_cell_impl.1} parent=5 // pred_check
        %p551 = pneg %p550
      $region58: #{_tgcn_cell_impl.1} parent=5 // pred_check_branch
        %553 = sbr.rel (%p551) target = $region60
      $region59: #{_tgcn_cell_impl.1} parent=5 // pred_region
        %s554 = ssub.s32 %s17, 2
        // Predicated region
        $region61: #{_tgcn_cell_impl.1} parent=59 // pred_check
          %p555 = pneg %p182
        $region62: #{_tgcn_cell_impl.1} parent=59 // pred_check_branch
          %557 = sbr.rel (%p555) target = $region64
        $region63: #{_tgcn_cell_impl.1} parent=59 // pred_region
          %s558 = sand.u32 %s167, 1
          %s559 = scalar_lea.sflag [#allocation4], %s558
          %s560 = sand.u32 %s167, 1
          %s561 = smul.addr %s560, 8
          %s562 = scalar_lea.vmem [#allocation7], %s561
          %564 = dma.done %s559, 128
        $region64: #{_tgcn_cell_impl.1} parent=59 // pred_fallthru
          _
      $region60: #{_tgcn_cell_impl.1} parent=5 // pred_fallthru
        _
    $region6: #{_tgcn_cell_impl.1} parent=1 // loop_footer
      %s21 = sadd.s32 1, %s17
    $region7: #{_tgcn_cell_impl.1} parent=1 // loop_footer_branch
      %16 = sbr.rel target = $region3
    $region8: #{_tgcn_cell_impl.1} parent=1 // loop_exit
      _
    %565 = vsyncpa [#allocation3], 1
    %s566 = scalar_lea.sflag [#allocation3], 1
    %567 = vsyncpa %s566, 1
    %568 = vsyncpa [#allocation6], 1
    %569 = vsyncpa [#allocation4], 1
    %s570 = scalar_lea.sflag [#allocation4], 1
    %571 = vsyncpa %s570, 1

</llo_original>
